<compile_context>
chip_gen: v7x
topology: tpu7x:2x2x1
jax: 0.10.0
libtpu: 0.0.40
codegen_flags: <defaults>
</compile_context>

<pallas_src>
import functools

import jax
import jax.numpy as jnp
import numpy as np
from jax.experimental import pallas as pl
from jax.experimental.pallas import tpu as pltpu

MV_DIM = 16       # geometric-algebra multivector dimension
LANE = 128        # TPU lane width
SUBLANE = 8       # f32 sublane tile


def _cdiv(a, b):
    return (a + b - 1) // b


def _round_up(a, b):
    return _cdiv(a, b) * b


def _next_pow2(n):
    p = 1
    while p < n:
        p *= 2
    return p


# ---------------------------------------------------------------------------
# Wrapper glue (plain JAX) — mirrors embed_vector / encode_tokens / embed_into_ga
# ---------------------------------------------------------------------------
def embed_vector(v):
    # gatr.interface.embed_vector: 4-vector goes into multivector slots 1..4
    mv = jnp.zeros(v.shape[:-1] + (MV_DIM,), v.dtype)
    return mv.at[..., 1:5].set(v)


def encode_tokens(type_token, global_token, token_size, batchsize):
    # isgatr=True branch of the PyTorch encode_tokens
    tt = jax.nn.one_hot(type_token, token_size, dtype=jnp.float32)                 # (P, N, T)
    tt = jnp.broadcast_to(tt[:, None], (tt.shape[0], batchsize) + tt.shape[1:])    # (P, B, N, T)
    gt = jax.nn.one_hot(global_token, token_size, dtype=jnp.float32)               # (P, T)
    gt = jnp.broadcast_to(gt[:, None], (gt.shape[0], batchsize, gt.shape[-1]))
    gt = gt[..., None, :]                                                          # (P, B, 1, T)
    return tt, gt


def embed_into_ga(inputs, type_token, global_token, token_size):
    P, Bz, N, _ = inputs.shape
    mv = embed_vector(inputs)[..., None, :]                  # (P, Bz, N, 1, 16)
    tt, gt = encode_tokens(type_token, global_token, token_size, Bz)
    scalars = tt.astype(inputs.dtype)
    gt = gt.astype(inputs.dtype)
    gt_mv = jnp.zeros((P, Bz, 1, 1, MV_DIM), mv.dtype)
    mv = jnp.concatenate((gt_mv, mv), axis=-3)               # (P, Bz, N+1, 1, 16)
    scalars = jnp.concatenate((gt, scalars), axis=-2)        # (P, Bz, N+1, T)
    return mv, scalars


def _plan_tiles(num_seqs, sp):
    """Pick (tb, group size, padded batch). tb is a multiple of the group size."""
    g = max(1, LANE // sp)                      # sequences packed per attention group
    m_cap_rows = 4096                           # rows per grid step; VMEM-safe on v5e/v6e/v7x
    tb_cap = max(g, ((m_cap_rows // sp) // g) * g)
    tb = min(tb_cap, _round_up(num_seqs, g))
    n_steps = _cdiv(num_seqs, tb)
    if n_steps > 1 and n_steps % 2 == 1:
        # even step count so both v7x TensorCores stay busy under "parallel"
        tb_alt = _round_up(_cdiv(num_seqs, n_steps + 1), g)
        if tb_alt >= g:
            tb = min(tb_cap, tb_alt)
    b_pad = _cdiv(num_seqs, tb) * tb
    return tb, g, b_pad


def build_net_inputs(inputs, type_token, global_token, token_size, fp):
    """embed_into_ga + flatten (mv | scalars) + pad to a compact bf16 slab."""
    P, Bz, N, _ = inputs.shape
    mv, scalars = embed_into_ga(inputs, type_token, global_token, token_size)
    S = N + 1
    x = jnp.concatenate([mv[..., 0, :], scalars], axis=-1)   # (P, Bz, S, 16+T)
    F = x.shape[-1]
    assert fp >= F, (fp, F)
    B = P * Bz
    SP = max(SUBLANE, _next_pow2(S))          # pow2 token pad -> shift/and sequence ids in-kernel
    tb, g, b_pad = _plan_tiles(B, SP)
    x = x.reshape(B, S, F)
    x = jnp.pad(x, ((0, b_pad - B), (0, SP - S), (0, fp - F)))
    meta = dict(B=B, S=S, SP=SP, B_pad=b_pad, TB=tb, G=g)
    return x.astype(jnp.bfloat16), meta       # compact bf16 slab (no 128-lane feature padding)


# ---------------------------------------------------------------------------
# Pallas kernel: the `net` hot path (grouped block-diagonal attention,
# tb sequences per grid step, in-kernel global-token extraction)
# ---------------------------------------------------------------------------
def gatr_block_kernel(x_ref, w_in_ref, b_in_ref, wqkv_ref, wo_ref,
                      w_out_ref, b_out_ref, out_ref, *, tb, sp, g, s_valid):
    h_dim = wqkv_ref.shape[0]
    ng = tb // g                 # attention groups per step
    gs = g * sp                  # rows per group (lane-dense: 128 when sp <= 128)
    shift = int(np.log2(sp))     # sp is a power of two by construction

    x = x_ref[...]                                                      # (tb*sp, fp) bf16
    # input projection (bf16 operands, f32 accumulation) + GELU (f32)
    h = jnp.dot(x, w_in_ref[...], preferred_element_type=jnp.float32)
    h = jax.nn.gelu(h + b_in_ref[...])                                  # (tb*sp, H) f32
    # fused Q|K|V projection: one lane-dense (H, 3H) matmul
    qkv = jnp.dot(h.astype(jnp.bfloat16), wqkv_ref[...],
                  preferred_element_type=jnp.float32)                   # (tb*sp, 3H)
    q = qkv[:, :h_dim].reshape(ng, gs, h_dim)
    k = qkv[:, h_dim:2 * h_dim].reshape(ng, gs, h_dim)
    v = qkv[:, 2 * h_dim:].reshape(ng, gs, h_dim)

    # grouped block-diagonal attention: one (gs x gs) score matmul per group
    scale = 1.0 / float(np.sqrt(h_dim))
    s = jnp.einsum("gqh,gkh->gqk", q, k,
                   preferred_element_type=jnp.float32) * scale          # (ng, gs, gs) f32
    qi = jax.lax.broadcasted_iota(jnp.int32, (gs, gs), 0)
    kj = jax.lax.broadcasted_iota(jnp.int32, (gs, gs), 1)
    same_seq = (qi >> shift) == (kj >> shift)        # block-diagonal: same sequence only
    valid_key = (kj & (sp - 1)) < s_valid            # drop padded key tokens
    mask = jnp.logical_and(same_seq, valid_key)
    s = jnp.where(mask[None, :, :], s, -1e30)        # scores stay f32 -> finite fill is safe

    m = jnp.max(s, axis=-1, keepdims=True)
    p = jnp.exp(s - m)
    attn = p / jnp.sum(p, axis=-1, keepdims=True)    # exact softmax (matches reference)
    a = jnp.einsum("gqk,gkh->gqh", attn, v,
                   preferred_element_type=jnp.float32)                  # (ng, gs, H)
    a = a.reshape(tb * sp, h_dim)
    h2 = h + jnp.dot(a.astype(jnp.bfloat16), wo_ref[...],
                     preferred_element_type=jnp.float32)

    # in-kernel extraction: only the global-token row (token 0) of each sequence
    h2_g = h2.reshape(tb, sp, h_dim)[:, 0, :]                           # (tb, H)
    out = jnp.dot(h2_g.astype(jnp.bfloat16), w_out_ref[...],
                  preferred_element_type=jnp.float32) + b_out_ref[...]  # (tb, OUT_PAD)
    out_ref[...] = out


def gatr_net_pallas(x, params, *, s_valid, tb, g):
    """x: (B_pad, SP, FP) bf16 -> (B_pad, OUT_PAD) f32 global-token outputs."""
    b_pad, sp, fp = x.shape
    n_steps = b_pad // tb
    out_pad = params["w_out"].shape[1]
    m_blk = tb * sp
    x2 = x.reshape(b_pad * sp, fp)            # lane-dense 2D slab, no in-kernel input reshape

    def const_spec(arr):
        n = arr.ndim
        return pl.BlockSpec(arr.shape, lambda i, _n=n: (0,) * _n)

    kernel = functools.partial(gatr_block_kernel, tb=tb, sp=sp, g=g, s_valid=s_valid)

    out = pl.pallas_call(
        kernel,
        out_shape=jax.ShapeDtypeStruct((b_pad, out_pad), jnp.float32),
        grid_spec=pltpu.PrefetchScalarGridSpec(
            num_scalar_prefetch=0,
            grid=(n_steps,),
            in_specs=[
                pl.BlockSpec((m_blk, fp), lambda i: (i, 0)),   # compact-F bf16 input tile
                const_spec(params["w_in"]),
                const_spec(params["b_in"]),
                const_spec(params["wqkv"]),
                const_spec(params["wo"]),
                const_spec(params["w_out"]),
                const_spec(params["b_out"]),
            ],
            out_specs=pl.BlockSpec((tb, out_pad), lambda i: (i, 0)),
        ),
        compiler_params=pltpu.CompilerParams(
            dimension_semantics=("parallel",),
            vmem_limit_bytes=48 * 1024 * 1024,
        ),
    )(x2, params["w_in"], params["b_in"], params["wqkv"],
      params["wo"], params["w_out"], params["b_out"])
    return out


# ---------------------------------------------------------------------------
# Full wrapper forward: embed_into_ga -> net (Pallas) -> extract_from_ga
# ---------------------------------------------------------------------------
def amplitude_gatr_forward(inputs, type_token, global_token, token_size, params):
    P, Bz, _, _ = inputs.shape
    fp = params["w_in"].shape[0]
    x, meta = build_net_inputs(inputs, type_token, global_token, token_size, fp)
    out_rows = gatr_net_pallas(x, params, s_valid=meta["S"],
                               tb=meta["TB"], g=meta["G"])               # (B_pad, OUT_PAD)
    # extract_from_ga: scalar mv component of the global token (done per-row in-kernel;
    # here we just pick the meaningful rows/column)
    amplitude = out_rows[:meta["B"], 0:1].reshape(P, Bz, 1)
    return amplitude


# ---------------------------------------------------------------------------
# Pure-JAX reference of the synthetic net (identical bf16-matmul recipe)
# ---------------------------------------------------------------------------
def gatr_net_ref(x, params, *, s_valid):
    # x: (B_pad, SP, FP) bf16
    H = params["wqkv"].shape[0]
    h = jnp.einsum("bsf,fh->bsh", x, params["w_in"],
                   preferred_element_type=jnp.float32) + params["b_in"]
    h = jax.nn.gelu(h)
    qkv = jnp.einsum("bsh,hk->bsk", h.astype(jnp.bfloat16), params["wqkv"],
                     preferred_element_type=jnp.float32)
    q, k, v = qkv[..., :H], qkv[..., H:2 * H], qkv[..., 2 * H:]
    s = jnp.einsum("bqh,bkh->bqk", q, k,
                   preferred_element_type=jnp.float32) / float(np.sqrt(H))
    kidx = jax.lax.broadcasted_iota(jnp.int32, s.shape, 2)
    s = jnp.where(kidx < s_valid, s, -1e30)
    attn = jax.nn.softmax(s, axis=-1)
    a = jnp.einsum("bqk,bkh->bqh", attn, v, preferred_element_type=jnp.float32)
    h2 = h + jnp.einsum("bsh,hk->bsk", a.astype(jnp.bfloat16), params["wo"],
                        preferred_element_type=jnp.float32)
    out = jnp.einsum("bsh,ho->bso", h2.astype(jnp.bfloat16), params["w_out"],
                     preferred_element_type=jnp.float32) + params["b_out"]
    return out


if __name__ == "__main__":
    P, Bz, N, T = 2, 4, 7, 8          # processes, batch, particles, token_size
    S = N + 1
    F = MV_DIM + T                    # 24 raw features (mv | one-hot scalars)
    FP = _round_up(F, SUBLANE)        # compact feature width (24) — no 128-lane padding in HBM
    H = LANE                          # hidden dim (lane-dense)
    OUT_PAD = LANE                    # output dim padded to 128 lanes (slot 0 = amplitude)

    key = jax.random.PRNGKey(0)
    k_in, k_tt, *wkeys = jax.random.split(key, 9)

    inputs = jax.random.normal(k_in, (P, Bz, N, 4), dtype=jnp.float32)
    type_token = jax.random.randint(k_tt, (P, N), 0, T)
    global_token = jnp.arange(P, dtype=jnp.int32) % T

    def init(k, shape, scale=0.1):
        return scale * jax.random.normal(k, shape, dtype=jnp.float32)

    params = {
        "w_in":  init(wkeys[0], (FP, H)).astype(jnp.bfloat16),
        "b_in":  init(wkeys[1], (1, H)),                           # f32 bias
        "wqkv":  init(wkeys[2], (H, 3 * H)).astype(jnp.bfloat16),  # fused Q|K|V
        "wo":    init(wkeys[3], (H, H)).astype(jnp.bfloat16),
        "w_out": init(wkeys[4], (H, OUT_PAD)).astype(jnp.bfloat16),
        "b_out": init(wkeys[5], (1, OUT_PAD)),                     # f32 bias
    }

    amplitude = amplitude_gatr_forward(inputs, type_token, global_token, T, params)
    amplitude = jax.block_until_ready(amplitude)
    assert amplitude.shape == (P, Bz, 1), amplitude.shape

    # correctness vs pure-JAX reference (same padding / bf16 recipe)
    x_ref_in, meta = build_net_inputs(inputs, type_token, global_token, T, FP)
    out_ref = gatr_net_ref(x_ref_in, params, s_valid=meta["S"])            # (B_pad, SP, OUT_PAD)
    amp_ref = out_ref[:meta["B"], 0, 0].reshape(P, Bz, 1)                  # global token, mv slot 0
    np.testing.assert_allclose(np.asarray(amplitude), np.asarray(amp_ref),
                               rtol=1e-2, atol=2e-3)

    print("KERNEL_OK")
</pallas_src>

<mosaic_0001>
module attributes {stable_mosaic.version = 11 : i64} {
  func.func @gatr_block_kernel(%arg0: i32, %arg1: memref<128x24xbf16, #tpu.memory_space<vmem>>, %arg2: memref<24x128xbf16, #tpu.memory_space<vmem>>, %arg3: memref<1x128xf32, #tpu.memory_space<vmem>>, %arg4: memref<128x384xbf16, #tpu.memory_space<vmem>>, %arg5: memref<128x128xbf16, #tpu.memory_space<vmem>>, %arg6: memref<128x128xbf16, #tpu.memory_space<vmem>>, %arg7: memref<1x128xf32, #tpu.memory_space<vmem>>, %arg8: memref<16x128xf32, #tpu.memory_space<vmem>>) attributes {dimension_semantics = [#tpu.dimension_semantics<parallel>], iteration_bounds = array<i64: 1>, scalar_prefetch = 0 : i64, scratch_operands = 0 : i64, tpu.core_type = #tpu.core_type<tc>, window_params = [{transform_indices = @transform_0, window_bounds = array<i64: 128, 24>}, {pipeline_mode = #tpu.pipeline_mode<synchronous>, transform_indices = @transform_1, window_bounds = array<i64: 24, 128>}, {pipeline_mode = #tpu.pipeline_mode<synchronous>, transform_indices = @transform_2, window_bounds = array<i64: 1, 128>}, {pipeline_mode = #tpu.pipeline_mode<synchronous>, transform_indices = @transform_3, window_bounds = array<i64: 128, 384>}, {pipeline_mode = #tpu.pipeline_mode<synchronous>, transform_indices = @transform_4, window_bounds = array<i64: 128, 128>}, {pipeline_mode = #tpu.pipeline_mode<synchronous>, transform_indices = @transform_5, window_bounds = array<i64: 128, 128>}, {pipeline_mode = #tpu.pipeline_mode<synchronous>, transform_indices = @transform_6, window_bounds = array<i64: 1, 128>}, {transform_indices = @transform_7, window_bounds = array<i64: 16, 128>}]} {
    %c0 = arith.constant 0 : index
    %c0_0 = arith.constant 0 : index
    %0 = vector.load %arg1[%c0, %c0_0] : memref<128x24xbf16, #tpu.memory_space<vmem>>, vector<128x24xbf16>
    %c0_1 = arith.constant 0 : index
    %c0_2 = arith.constant 0 : index
    %1 = vector.load %arg2[%c0_1, %c0_2] : memref<24x128xbf16, #tpu.memory_space<vmem>>, vector<24x128xbf16>
    %cst = arith.constant dense<0.000000e+00> : vector<128x128xf32>
    %2 = tpu.matmul %0, %1, %cst {dimension_numbers = #tpu.dot_dimension_numbers<[1], [0], [0], [1], [0, 0, 1, 1], [], []>} : vector<128x24xbf16>, vector<24x128xbf16>, vector<128x128xf32> -> vector<128x128xf32>
    %c0_3 = arith.constant 0 : index
    %c0_4 = arith.constant 0 : index
    %3 = vector.load %arg3[%c0_3, %c0_4] : memref<1x128xf32, #tpu.memory_space<vmem>>, vector<1x128xf32>
    %4 = vector.broadcast %3 : vector<1x128xf32> to vector<128x128xf32>
    %5 = arith.addf %2, %4 : vector<128x128xf32>
    %6 = arith.mulf %5, %5 : vector<128x128xf32>
    %7 = arith.mulf %5, %6 : vector<128x128xf32>
    %cst_5 = arith.constant 4.471500e-02 : f32
    %8 = vector.broadcast %cst_5 : f32 to vector<128x128xf32>
    %9 = arith.mulf %8, %7 : vector<128x128xf32>
    %10 = arith.addf %5, %9 : vector<128x128xf32>
    %cst_6 = arith.constant 0.797884583 : f32
    %11 = vector.broadcast %cst_6 : f32 to vector<128x128xf32>
    %12 = arith.mulf %11, %10 : vector<128x128xf32>
    %13 = math.tanh %12 : vector<128x128xf32>
    %cst_7 = arith.constant 1.000000e+00 : f32
    %14 = vector.broadcast %cst_7 : f32 to vector<128x128xf32>
    %15 = arith.addf %14, %13 : vector<128x128xf32>
    %cst_8 = arith.constant 5.000000e-01 : f32
    %16 = vector.broadcast %cst_8 : f32 to vector<128x128xf32>
    %17 = arith.mulf %16, %15 : vector<128x128xf32>
    %18 = arith.mulf %5, %17 : vector<128x128xf32>
    %19 = arith.truncf %18 : vector<128x128xf32> to vector<128x128xbf16>
    %c0_9 = arith.constant 0 : index
    %c0_10 = arith.constant 0 : index
    %20 = vector.load %arg4[%c0_9, %c0_10] : memref<128x384xbf16, #tpu.memory_space<vmem>>, vector<128x384xbf16>
    %cst_11 = arith.constant dense<0.000000e+00> : vector<128x384xf32>
    %21 = tpu.matmul %19, %20, %cst_11 {dimension_numbers = #tpu.dot_dimension_numbers<[1], [0], [0], [1], [0, 0, 1, 1], [], []>} : vector<128x128xbf16>, vector<128x384xbf16>, vector<128x384xf32> -> vector<128x384xf32>
    %22 = vector.extract_strided_slice %21 {offsets = [0, 0], sizes = [128, 128], strides = [1, 1]} : vector<128x384xf32> to vector<128x128xf32>
    %23 = vector.shape_cast %22 : vector<128x128xf32> to vector<1x128x128xf32>
    %24 = vector.extract_strided_slice %21 {offsets = [0, 128], sizes = [128, 128], strides = [1, 1]} : vector<128x384xf32> to vector<128x128xf32>
    %25 = vector.shape_cast %24 : vector<128x128xf32> to vector<1x128x128xf32>
    %26 = vector.extract_strided_slice %21 {offsets = [0, 256], sizes = [128, 128], strides = [1, 1]} : vector<128x384xf32> to vector<128x128xf32>
    %27 = vector.shape_cast %26 : vector<128x128xf32> to vector<1x128x128xf32>
    "tpu.trace_start"() <{level = 10 : i32, message = "gqh,gkh->gqk"}> : () -> ()
    %cst_12 = arith.constant dense<0.000000e+00> : vector<1x128x128xf32>
    %28 = tpu.matmul %23, %25, %cst_12 {dimension_numbers = #tpu.dot_dimension_numbers<[2], [2], [1], [1], [0, 0, 0, 1, 1, 1], [0], [0]>} : vector<1x128x128xf32>, vector<1x128x128xf32>, vector<1x128x128xf32> -> vector<1x128x128xf32>
    "tpu.trace_stop"() : () -> ()
    %cst_13 = arith.constant 0.0883883461 : f32
    %29 = vector.broadcast %cst_13 : f32 to vector<1x128x128xf32>
    %30 = arith.mulf %28, %29 : vector<1x128x128xf32>
    %31 = tpu.iota {dimensions = array<i32: 0>} : vector<128x128xi32>
    %32 = tpu.iota {dimensions = array<i32: 1>} : vector<128x128xi32>
    %c3_i32 = arith.constant 3 : i32
    %33 = vector.broadcast %c3_i32 : i32 to vector<128x128xi32>
    %34 = arith.shrsi %31, %33 : vector<128x128xi32>
    %c3_i32_14 = arith.constant 3 : i32
    %35 = vector.broadcast %c3_i32_14 : i32 to vector<128x128xi32>
    %36 = arith.shrsi %32, %35 : vector<128x128xi32>
    %37 = arith.cmpi eq, %34, %36 : vector<128x128xi32>
    %c7_i32 = arith.constant 7 : i32
    %38 = vector.broadcast %c7_i32 : i32 to vector<128x128xi32>
    %39 = arith.andi %32, %38 : vector<128x128xi32>
    %c8_i32 = arith.constant 8 : i32
    %40 = vector.broadcast %c8_i32 : i32 to vector<128x128xi32>
    %41 = arith.cmpi slt, %39, %40 : vector<128x128xi32>
    %42 = arith.andi %37, %41 : vector<128x128xi1>
    %43 = vector.shape_cast %42 : vector<128x128xi1> to vector<1x128x128xi1>
    %cst_15 = arith.constant -1.000000e+30 : f32
    %44 = vector.broadcast %cst_15 : f32 to vector<1x128x128xf32>
    %45 = arith.select %43, %30, %44 : vector<1x128x128xi1>, vector<1x128x128xf32>
    %cst_16 = arith.constant dense<0xFF800000> : vector<1x128xf32>
    %46 = vector.multi_reduction <maximumf>, %45, %cst_16 [2] : vector<1x128x128xf32> to vector<1x128xf32>
    %47 = vector.shape_cast %46 : vector<1x128xf32> to vector<1x128x1xf32>
    %48 = vector.broadcast %47 : vector<1x128x1xf32> to vector<1x128x128xf32>
    %49 = arith.subf %45, %48 : vector<1x128x128xf32>
    %50 = math.exp %49 : vector<1x128x128xf32>
    %cst_17 = arith.constant dense<0.000000e+00> : vector<1x128xf32>
    %51 = vector.multi_reduction <add>, %50, %cst_17 [2] : vector<1x128x128xf32> to vector<1x128xf32>
    %52 = vector.shape_cast %51 : vector<1x128xf32> to vector<1x128x1xf32>
    %53 = vector.broadcast %52 : vector<1x128x1xf32> to vector<1x128x128xf32>
    %54 = arith.divf %50, %53 : vector<1x128x128xf32>
    "tpu.trace_start"() <{level = 10 : i32, message = "gqk,gkh->gqh"}> : () -> ()
    %cst_18 = arith.constant dense<0.000000e+00> : vector<1x128x128xf32>
    %55 = tpu.matmul %54, %27, %cst_18 {dimension_numbers = #tpu.dot_dimension_numbers<[2], [1], [1], [2], [0, 0, 0, 1, 1, 2], [0], [0]>} : vector<1x128x128xf32>, vector<1x128x128xf32>, vector<1x128x128xf32> -> vector<1x128x128xf32>
    "tpu.trace_stop"() : () -> ()
    %56 = vector.shape_cast %55 : vector<1x128x128xf32> to vector<128x128xf32>
    %57 = arith.truncf %56 : vector<128x128xf32> to vector<128x128xbf16>
    %c0_19 = arith.constant 0 : index
    %c0_20 = arith.constant 0 : index
    %58 = vector.load %arg5[%c0_19, %c0_20] : memref<128x128xbf16, #tpu.memory_space<vmem>>, vector<128x128xbf16>
    %cst_21 = arith.constant dense<0.000000e+00> : vector<128x128xf32>
    %59 = tpu.matmul %57, %58, %cst_21 {dimension_numbers = #tpu.dot_dimension_numbers<[1], [0], [0], [1], [0, 0, 1, 1], [], []>} : vector<128x128xbf16>, vector<128x128xbf16>, vector<128x128xf32> -> vector<128x128xf32>
    %60 = arith.addf %18, %59 : vector<128x128xf32>
    %61 = vector.shape_cast %60 : vector<128x128xf32> to vector<16x8x128xf32>
    %62 = vector.extract_strided_slice %61 {offsets = [0, 0, 0], sizes = [16, 1, 128], strides = [1, 1, 1]} : vector<16x8x128xf32> to vector<16x1x128xf32>
    %63 = vector.shape_cast %62 : vector<16x1x128xf32> to vector<16x128xf32>
    %64 = arith.truncf %63 : vector<16x128xf32> to vector<16x128xbf16>
    %c0_22 = arith.constant 0 : index
    %c0_23 = arith.constant 0 : index
    %65 = vector.load %arg6[%c0_22, %c0_23] : memref<128x128xbf16, #tpu.memory_space<vmem>>, vector<128x128xbf16>
    %cst_24 = arith.constant dense<0.000000e+00> : vector<16x128xf32>
    %66 = tpu.matmul %64, %65, %cst_24 {dimension_numbers = #tpu.dot_dimension_numbers<[1], [0], [0], [1], [0, 0, 1, 1], [], []>} : vector<16x128xbf16>, vector<128x128xbf16>, vector<16x128xf32> -> vector<16x128xf32>
    %c0_25 = arith.constant 0 : index
    %c0_26 = arith.constant 0 : index
    %67 = vector.load %arg7[%c0_25, %c0_26] : memref<1x128xf32, #tpu.memory_space<vmem>>, vector<1x128xf32>
    %68 = vector.broadcast %67 : vector<1x128xf32> to vector<16x128xf32>
    %69 = arith.addf %66, %68 : vector<16x128xf32>
    %c0_27 = arith.constant 0 : index
    %c0_28 = arith.constant 0 : index
    %70 = vector.load %arg8[%c0_27, %c0_28] : memref<16x128xf32, #tpu.memory_space<vmem>>, vector<16x128xf32>
    tpu.vector_store %arg8[%c0_27, %c0_28], %69 {strides = array<i32>} : memref<16x128xf32, #tpu.memory_space<vmem>>, vector<16x128xf32>,
    return
  }
  func.func @transform_0(%arg0: i32) -> (i32, i32) {
    %c0_i32 = arith.constant 0 : i32
    %c0_i32_0 = arith.constant 0 : i32
    return %arg0, %c0_i32 : i32, i32
  }
  func.func @transform_1(%arg0: i32) -> (i32, i32) {
    %c0_i32 = arith.constant 0 : i32
    %c0_i32_0 = arith.constant 0 : i32
    %c0_i32_1 = arith.constant 0 : i32
    return %c0_i32, %c0_i32_0 : i32, i32
  }
  func.func @transform_2(%arg0: i32) -> (i32, i32) {
    %c0_i32 = arith.constant 0 : i32
    %c0_i32_0 = arith.constant 0 : i32
    %c0_i32_1 = arith.constant 0 : i32
    return %c0_i32, %c0_i32_0 : i32, i32
  }
  func.func @transform_3(%arg0: i32) -> (i32, i32) {
    %c0_i32 = arith.constant 0 : i32
    %c0_i32_0 = arith.constant 0 : i32
    %c0_i32_1 = arith.constant 0 : i32
    return %c0_i32, %c0_i32_0 : i32, i32
  }
  func.func @transform_4(%arg0: i32) -> (i32, i32) {
    %c0_i32 = arith.constant 0 : i32
    %c0_i32_0 = arith.constant 0 : i32
    %c0_i32_1 = arith.constant 0 : i32
    return %c0_i32, %c0_i32_0 : i32, i32
  }
  func.func @transform_5(%arg0: i32) -> (i32, i32) {
    %c0_i32 = arith.constant 0 : i32
    %c0_i32_0 = arith.constant 0 : i32
    %c0_i32_1 = arith.constant 0 : i32
    return %c0_i32, %c0_i32_0 : i32, i32
  }
  func.func @transform_6(%arg0: i32) -> (i32, i32) {
    %c0_i32 = arith.constant 0 : i32
    %c0_i32_0 = arith.constant 0 : i32
    %c0_i32_1 = arith.constant 0 : i32
    return %c0_i32, %c0_i32_0 : i32, i32
  }
  func.func @transform_7(%arg0: i32) -> (i32, i32) {
    %c0_i32 = arith.constant 0 : i32
    %c0_i32_0 = arith.constant 0 : i32
    return %arg0, %c0_i32 : i32, i32
  }
}

</mosaic_0001>

<llo_original>
// kernel: tpu_custom_call.1
$region0: #{tpu_custom_call.1}
  #allocation0 [shape = 'u32[]', space=smem, size = 0x4, offset = 0x4, fixed_abs, tag = 'smem constant byte address 0x4 - core index']
  #allocation1 [shape = 'u32[144,128]{1,0:T(1,128)}', space=vmem, size = 0x12000, scoped, tag = 'internal scratch']
  %s0 = inlined_call_operand.vmem [shape: bf16[128,24], index: 0, kind: input, shape index: {}]
  %s1 = inlined_call_operand.vmem [shape: bf16[24,128], index: 1, kind: input, shape index: {}]
  %s2 = inlined_call_operand.vmem [shape: f32[1,128], index: 2, kind: input, shape index: {}]
  %s3 = inlined_call_operand.hbm [shape: bf16[128,384], index: 3, kind: input, shape index: {}]
  %s4 = inlined_call_operand.vmem [shape: bf16[128,128], index: 4, kind: input, shape index: {}]
  %s5 = inlined_call_operand.hbm [shape: bf16[128,128], index: 5, kind: input, shape index: {}]
  %s6 = inlined_call_operand.vmem [shape: f32[1,128], index: 6, kind: input, shape index: {}]
  %s7 = inlined_call_operand.hbm [shape: f32[16,128], index: 7, kind: output, shape index: {}]
  %s8 = sld [smem:[#allocation0]]
  $region46: #{tpu_custom_call.1} parent=0
    _
  %s10 = ssub.s32 1, %s8
  %s11 = scalar_select 0, %s10, %s8
  $region1: #{tpu_custom_call.1} parent=0
    #allocation2 [shape = 'u8[98304]{0}', space=vmem, size = 0x18000, scoped, tag = 'input window, operand 3, single buffered']
    #allocation3 [shape = 's32[1]{0}', space=sflag, size = 0x4, scoped, tag = 'scoped memory for tpu_custom_call.1']
    #allocation4 [shape = 's32[1]{0}', space=sflag, size = 0x4, scoped, tag = 'scoped memory for tpu_custom_call.1']
    #allocation5 [shape = 'u8[32768]{0}', space=vmem, size = 0x8000, scoped, tag = 'input window, operand 5, single buffered']
    #allocation6 [shape = 's32[1]{0}', space=sflag, size = 0x4, scoped, tag = 'scoped memory for tpu_custom_call.1']
    #allocation7 [shape = 'u8[8192]{0}', space=vmem, size = 0x2000, scoped, tag = 'output window, operand 0, single buffered']
    %12 = vsyncpa [#allocation3], 0
    %13 = vsyncpa [#allocation6], 0
    %14 = vsyncpa [#allocation4], 0
    // Predicated region
    $region2: #{tpu_custom_call.1} parent=1 // pred_check
      _
    $region3: #{tpu_custom_call.1} parent=1 // pred_check_branch
      %16 = sbr.rel (0) target = $region5
    $region4: #{tpu_custom_call.1} parent=1 // pred_region
      _
    $region5: #{tpu_custom_call.1} parent=1 // pred_fallthru
      _
    // Predicated region
    $region6: #{tpu_custom_call.1} parent=1 // pred_check
      _
    $region7: #{tpu_custom_call.1} parent=1 // pred_check_branch
      %18 = sbr.rel (0) target = $region9
    $region8: #{tpu_custom_call.1} parent=1 // pred_region
      _
    $region9: #{tpu_custom_call.1} parent=1 // pred_fallthru
      _
    // Predicated region
    $region10: #{tpu_custom_call.1} parent=1 // pred_check
      _
    $region11: #{tpu_custom_call.1} parent=1 // pred_check_branch
      %20 = sbr.rel (0) target = $region13
    $region12: #{tpu_custom_call.1} parent=1 // pred_region
      _
    $region13: #{tpu_custom_call.1} parent=1 // pred_fallthru
      _
    // Predicated region
    $region14: #{tpu_custom_call.1} parent=1 // pred_check
      _
    $region15: #{tpu_custom_call.1} parent=1 // pred_check_branch
      %22 = sbr.rel (0) target = $region17
    $region16: #{tpu_custom_call.1} parent=1 // pred_region
      %s24 = ssub.s32 3072, 3072
      %25 = vsyncadd [#allocation3], %s24
      %s26 = sshll.u32 [#allocation2], 4
      %s27 = int_to_ptr.vmem [resolvable:$true] %s26
      %32 = dma.hbm_to_vmem [thread:$0]  %s3, 3072, %s27, [#allocation3], 192, 192, 12
    $region17: #{tpu_custom_call.1} parent=1 // pred_fallthru
      _
    // Predicated region
    $region18: #{tpu_custom_call.1} parent=1 // pred_check
      _
    $region19: #{tpu_custom_call.1} parent=1 // pred_check_branch
      %34 = sbr.rel (0) target = $region21
    $region20: #{tpu_custom_call.1} parent=1 // pred_region
      _
    $region21: #{tpu_custom_call.1} parent=1 // pred_fallthru
      _
    // Predicated region
    $region22: #{tpu_custom_call.1} parent=1 // pred_check
      _
    $region23: #{tpu_custom_call.1} parent=1 // pred_check_branch
      %36 = sbr.rel (0) target = $region25
    $region24: #{tpu_custom_call.1} parent=1 // pred_region
      %s38 = ssub.s32 1024, 1024
      %39 = vsyncadd [#allocation6], %s38
      %s40 = sshll.u32 [#allocation5], 4
      %s41 = int_to_ptr.vmem [resolvable:$true] %s40
      %46 = dma.hbm_to_vmem [thread:$0]  %s5, 1024, %s41, [#allocation6], 64, 64, 4
    $region25: #{tpu_custom_call.1} parent=1 // pred_fallthru
      _
    // Predicated region
    $region26: #{tpu_custom_call.1} parent=1 // pred_check
      _
    $region27: #{tpu_custom_call.1} parent=1 // pred_check_branch
      %48 = sbr.rel (0) target = $region29
    $region28: #{tpu_custom_call.1} parent=1 // pred_region
      _
    $region29: #{tpu_custom_call.1} parent=1 // pred_fallthru
      _
    // Predicated region
    $region30: #{tpu_custom_call.1} parent=1 // pred_check
      _
    $region31: #{tpu_custom_call.1} parent=1 // pred_check_branch
      %50 = sbr.rel (0) target = $region33
    $region32: #{tpu_custom_call.1} parent=1 // pred_region
      %51 = dma.done [#allocation3], 3072
    $region33: #{tpu_custom_call.1} parent=1 // pred_fallthru
      _
    // Predicated region
    $region34: #{tpu_custom_call.1} parent=1 // pred_check
      _
    $region35: #{tpu_custom_call.1} parent=1 // pred_check_branch
      %53 = sbr.rel (0) target = $region37
    $region36: #{tpu_custom_call.1} parent=1 // pred_region
      %54 = dma.done [#allocation6], 1024
    $region37: #{tpu_custom_call.1} parent=1 // pred_fallthru
      _
    %v56 = vld [vmem:[%s0] sm:$0xf]
    %v57 = vld [vmem:[%s0 + $0x4] sm:$0xf]
    %v58 = vld [vmem:[%s0 + $0x8] sm:$0xf]
    %v59 = vld [vmem:[%s0 + $0xc] sm:$0xf]
    %v60 = vld [vmem:[%s0 + $0x10] sm:$0xf]
    %v61 = vld [vmem:[%s0 + $0x14] sm:$0xf]
    %v62 = vld [vmem:[%s0 + $0x18] sm:$0xf]
    %v63 = vld [vmem:[%s0 + $0x1c] sm:$0xf]
    %v64 = vld [vmem:[%s0 + $0x20] sm:$0xf]
    %v65 = vld [vmem:[%s0 + $0x24] sm:$0xf]
    %v66 = vld [vmem:[%s0 + $0x28] sm:$0xf]
    %v67 = vld [vmem:[%s0 + $0x2c] sm:$0xf]
    %v68 = vld [vmem:[%s0 + $0x30] sm:$0xf]
    %v69 = vld [vmem:[%s0 + $0x34] sm:$0xf]
    %v70 = vld [vmem:[%s0 + $0x38] sm:$0xf]
    %v71 = vld [vmem:[%s0 + $0x3c] sm:$0xf]
    %v72 = vld [vmem:[%s1] sm:$0xf]
    %v73 = vld [vmem:[%s1 + $0x4] sm:$0xf]
    %v74 = vld [vmem:[%s1 + $0x8] sm:$0xf]
    %v75 = vld [vmem:[%s2] sm:$0x1]
    %v77 = vlaneseq
    %v78 = vshrl.u32 %v77, 7
    %v79 = vsub.s32 0, %v78
    %v80 = vrot.slane %v75, %v79
    %v98 = vunpack.c.l.b16 %v56
    %v99 = vunpack.c.l.b16 %v57
    %v100 = vunpack.c.l.b16 %v58
    %v101 = vunpack.c.l.b16 %v59
    %v102 = vunpack.c.l.b16 %v60
    %v103 = vunpack.c.l.b16 %v61
    %v104 = vunpack.c.l.b16 %v62
    %v105 = vunpack.c.l.b16 %v63
    %v106 = vunpack.c.l.b16 %v64
    %v107 = vunpack.c.l.b16 %v65
    %v108 = vunpack.c.l.b16 %v66
    %v109 = vunpack.c.l.b16 %v67
    %v110 = vunpack.c.l.b16 %v68
    %v111 = vunpack.c.l.b16 %v69
    %v112 = vunpack.c.l.b16 %v70
    %v113 = vunpack.c.l.b16 %v71
    %v114 = vpack.c.b16 %v99, %v98
    %v115 = vpack.c.b16 %v101, %v100
    %v116 = vpack.c.b16 %v103, %v102
    %v117 = vpack.c.b16 %v105, %v104
    %v118 = vpack.c.b16 %v107, %v106
    %v119 = vpack.c.b16 %v109, %v108
    %v120 = vpack.c.b16 %v111, %v110
    %v121 = vpack.c.b16 %v113, %v112
    %v125 = vunpack.c.l.b16 %v72
    %v126 = vunpack.c.l.b16 %v73
    %v127 = vunpack.c.l.b16 %v74
    %v128 = vpack.c.b16 %v126, %v125
    %v129 = vpack.c.b16 %v127, %v127
    %vm131 = vcmask 195584
    %v133 = vsel %vm131, %v114, 0
    %v136 = vsel %vm131, %v115, 0
    %v139 = vsel %vm131, %v116, 0
    %v142 = vsel %vm131, %v117, 0
    %v145 = vsel %vm131, %v118, 0
    %v148 = vsel %vm131, %v119, 0
    %v151 = vsel %vm131, %v120, 0
    %v154 = vsel %vm131, %v121, 0
    %vm156 = vcmask 1043456
    %v158 = vsel %vm156, %v129, 0
    %160 = vmatprep.subr.bf16.mxu0 0
    %161 = vmatpush1.bf16.msra.mxu0 %v128
    %162 = vmatprep.subr.bf16.mxu0 0
    %163 = vmatpush1.bf16.msra.mxu0 %v158
    %164 = vmatprep.subr.bf16.mxu0 0
    %165 = vmatpush1.bf16.msra.mxu0 0
    %166 = vmatprep.subr.bf16.mxu0 0
    %167 = vmatpush1.bf16.msra.mxu0 0
    %168 = vmatprep.subr.bf16.mxu0 0
    %169 = vmatpush1.bf16.msra.mxu0 0
    %170 = vmatprep.subr.bf16.mxu0 0
    %171 = vmatpush1.bf16.msra.mxu0 0
    %172 = vmatprep.subr.bf16.mxu0 0
    %173 = vmatpush1.bf16.msra.mxu0 0
    %174 = vmatprep.subr.bf16.mxu0 0
    %175 = vmatpush1.bf16.msra.mxu0 0
    %176 = vmatprep.subr.bf16.mxu0 0
    %177 = vmatpush1.bf16.msra.mxu0 0
    %178 = vmatprep.subr.bf16.mxu0 0
    %179 = vmatpush1.bf16.msra.mxu0 0
    %180 = vmatprep.subr.bf16.mxu0 0
    %181 = vmatpush1.bf16.msra.mxu0 0
    %182 = vmatprep.subr.bf16.mxu0 0
    %183 = vmatpush1.bf16.msra.mxu0 0
    %184 = vmatprep.subr.bf16.mxu0 0
    %185 = vmatpush1.bf16.msra.mxu0 0
    %186 = vmatprep.subr.bf16.mxu0 0
    %187 = vmatpush1.bf16.msra.mxu0 0
    %188 = vmatprep.subr.bf16.mxu0 0
    %189 = vmatpush1.bf16.msra.mxu0 0
    %190 = vmatprep.subr.bf16.mxu0 0
    %191 = vmatpush1.bf16.msra.mxu0 0
    %192 = vmatprep.mubr.bf16.mxu0 0
    %193 = vmatmul.mubr.bf16.gmra.mrb[0].mxu0 %v133
    %v194 = vpop.f32.mrb[0].mxu0
    %v195 = vadd.f32 %v80, %v194
    %v196 = vpop.f32.mrb[0].mxu0
    %v197 = vpop.f32.mrb[0].mxu0
    %v198 = vadd.f32 %v80, %v197
    %v199 = vpop.f32.mrb[0].mxu0
    %200 = vmatprep.mubr.bf16.mxu0 0
    %201 = vmatmul.mubr.bf16.gmra.mrb[0].mxu0 %v136
    %v202 = vpop.f32.mrb[0].mxu0
    %v203 = vadd.f32 %v80, %v202
    %v204 = vpop.f32.mrb[0].mxu0
    %v205 = vpop.f32.mrb[0].mxu0
    %v206 = vadd.f32 %v80, %v205
    %v207 = vpop.f32.mrb[0].mxu0
    %208 = vmatprep.mubr.bf16.mxu0 0
    %209 = vmatmul.mubr.bf16.gmra.mrb[0].mxu0 %v139
    %v210 = vpop.f32.mrb[0].mxu0
    %v211 = vadd.f32 %v80, %v210
    %v212 = vpop.f32.mrb[0].mxu0
    %v213 = vpop.f32.mrb[0].mxu0
    %v214 = vadd.f32 %v80, %v213
    %v215 = vpop.f32.mrb[0].mxu0
    %216 = vmatprep.mubr.bf16.mxu0 0
    %217 = vmatmul.mubr.bf16.gmra.mrb[0].mxu0 %v142
    %v218 = vpop.f32.mrb[0].mxu0
    %v219 = vadd.f32 %v80, %v218
    %v220 = vpop.f32.mrb[0].mxu0
    %v221 = vpop.f32.mrb[0].mxu0
    %v222 = vadd.f32 %v80, %v221
    %v223 = vpop.f32.mrb[0].mxu0
    %224 = vmatprep.mubr.bf16.mxu0 0
    %225 = vmatmul.mubr.bf16.gmra.mrb[0].mxu0 %v145
    %v226 = vpop.f32.mrb[0].mxu0
    %v227 = vadd.f32 %v80, %v226
    %v228 = vpop.f32.mrb[0].mxu0
    %v229 = vpop.f32.mrb[0].mxu0
    %v230 = vadd.f32 %v80, %v229
    %v231 = vpop.f32.mrb[0].mxu0
    %232 = vmatprep.mubr.bf16.mxu0 0
    %233 = vmatmul.mubr.bf16.gmra.mrb[0].mxu0 %v148
    %v234 = vpop.f32.mrb[0].mxu0
    %v235 = vadd.f32 %v80, %v234
    %v236 = vpop.f32.mrb[0].mxu0
    %v237 = vpop.f32.mrb[0].mxu0
    %v238 = vadd.f32 %v80, %v237
    %v239 = vpop.f32.mrb[0].mxu0
    %240 = vmatprep.mubr.bf16.mxu0 0
    %241 = vmatmul.mubr.bf16.gmra.mrb[0].mxu0 %v151
    %v242 = vpop.f32.mrb[0].mxu0
    %v243 = vadd.f32 %v80, %v242
    %v244 = vpop.f32.mrb[0].mxu0
    %v245 = vpop.f32.mrb[0].mxu0
    %v246 = vadd.f32 %v80, %v245
    %v247 = vpop.f32.mrb[0].mxu0
    %248 = vmatprep.mubr.bf16.mxu0 0
    %249 = vmatmul.mubr.bf16.gmra.mrb[0].mxu0 %v154
    %v250 = vpop.f32.mrb[0].mxu0
    %v251 = vadd.f32 %v80, %v250
    %v252 = vpop.f32.mrb[0].mxu0
    %v253 = vpop.f32.mrb[0].mxu0
    %v254 = vadd.f32 %v80, %v253
    %v255 = vpop.f32.mrb[0].mxu0
    %256 = vdwg.mxu0
    %v257 = vmul.f32 %v195, %v195
    %v258 = vmul.f32 %v198, %v198
    %v259 = vmul.f32 %v203, %v203
    %v260 = vmul.f32 %v206, %v206
    %v261 = vmul.f32 %v211, %v211
    %v262 = vmul.f32 %v214, %v214
    %v263 = vmul.f32 %v219, %v219
    %v264 = vmul.f32 %v222, %v222
    %v265 = vmul.f32 %v227, %v227
    %v266 = vmul.f32 %v230, %v230
    %v267 = vmul.f32 %v235, %v235
    %v268 = vmul.f32 %v238, %v238
    %v269 = vmul.f32 %v243, %v243
    %v270 = vmul.f32 %v246, %v246
    %v271 = vmul.f32 %v251, %v251
    %v272 = vmul.f32 %v254, %v254
    %v273 = vmul.f32 %v195, %v257
    %v274 = vmul.f32 %v198, %v258
    %v275 = vmul.f32 %v203, %v259
    %v276 = vmul.f32 %v206, %v260
    %v277 = vmul.f32 %v211, %v261
    %v278 = vmul.f32 %v214, %v262
    %v279 = vmul.f32 %v219, %v263
    %v280 = vmul.f32 %v222, %v264
    %v281 = vmul.f32 %v227, %v265
    %v282 = vmul.f32 %v230, %v266
    %v283 = vmul.f32 %v235, %v267
    %v284 = vmul.f32 %v238, %v268
    %v285 = vmul.f32 %v243, %v269
    %v286 = vmul.f32 %v246, %v270
    %v287 = vmul.f32 %v251, %v271
    %v288 = vmul.f32 %v254, %v272
    %v289 = vmul.f32 %v273, 0.044715
    %v290 = vmul.f32 %v274, 0.044715
    %v291 = vmul.f32 %v275, 0.044715
    %v292 = vmul.f32 %v276, 0.044715
    %v293 = vmul.f32 %v277, 0.044715
    %v294 = vmul.f32 %v278, 0.044715
    %v295 = vmul.f32 %v279, 0.044715
    %v296 = vmul.f32 %v280, 0.044715
    %v297 = vmul.f32 %v281, 0.044715
    %v298 = vmul.f32 %v282, 0.044715
    %v299 = vmul.f32 %v283, 0.044715
    %v300 = vmul.f32 %v284, 0.044715
    %v301 = vmul.f32 %v285, 0.044715
    %v302 = vmul.f32 %v286, 0.044715
    %v303 = vmul.f32 %v287, 0.044715
    %v304 = vmul.f32 %v288, 0.044715
    %v305 = vadd.f32 %v195, %v289
    %v306 = vadd.f32 %v198, %v290
    %v307 = vadd.f32 %v203, %v291
    %v308 = vadd.f32 %v206, %v292
    %v309 = vadd.f32 %v211, %v293
    %v310 = vadd.f32 %v214, %v294
    %v311 = vadd.f32 %v219, %v295
    %v312 = vadd.f32 %v222, %v296
    %v313 = vadd.f32 %v227, %v297
    %v314 = vadd.f32 %v230, %v298
    %v315 = vadd.f32 %v235, %v299
    %v316 = vadd.f32 %v238, %v300
    %v317 = vadd.f32 %v243, %v301
    %v318 = vadd.f32 %v246, %v302
    %v319 = vadd.f32 %v251, %v303
    %v320 = vadd.f32 %v254, %v304
    %v321 = vmul.f32 %v305, 0.7978846
    %v322 = vmul.f32 %v306, 0.7978846
    %v323 = vmul.f32 %v307, 0.7978846
    %v324 = vmul.f32 %v308, 0.7978846
    %v325 = vmul.f32 %v309, 0.7978846
    %v326 = vmul.f32 %v310, 0.7978846
    %v327 = vmul.f32 %v311, 0.7978846
    %v328 = vmul.f32 %v312, 0.7978846
    %v329 = vmul.f32 %v313, 0.7978846
    %v330 = vmul.f32 %v314, 0.7978846
    %v331 = vmul.f32 %v315, 0.7978846
    %v332 = vmul.f32 %v316, 0.7978846
    %v333 = vmul.f32 %v317, 0.7978846
    %v334 = vmul.f32 %v318, 0.7978846
    %v335 = vmul.f32 %v319, 0.7978846
    %v336 = vmul.f32 %v320, 0.7978846
    %v337 = vtanh.pop %v321
    %v338 = vtanh.pop %v322
    %v339 = vtanh.pop %v323
    %v340 = vtanh.pop %v324
    %v341 = vtanh.pop %v325
    %v342 = vtanh.pop %v326
    %v343 = vtanh.pop %v327
    %v344 = vtanh.pop %v328
    %v345 = vtanh.pop %v329
    %v346 = vtanh.pop %v330
    %v347 = vtanh.pop %v331
    %v348 = vtanh.pop %v332
    %v349 = vtanh.pop %v333
    %v350 = vtanh.pop %v334
    %v351 = vtanh.pop %v335
    %v352 = vtanh.pop %v336
    %v353 = vadd.f32 %v337, 1.0
    %v354 = vadd.f32 %v338, 1.0
    %v355 = vadd.f32 %v339, 1.0
    %v356 = vadd.f32 %v340, 1.0
    %v357 = vadd.f32 %v341, 1.0
    %v358 = vadd.f32 %v342, 1.0
    %v359 = vadd.f32 %v343, 1.0
    %v360 = vadd.f32 %v344, 1.0
    %v361 = vadd.f32 %v345, 1.0
    %v362 = vadd.f32 %v346, 1.0
    %v363 = vadd.f32 %v347, 1.0
    %v364 = vadd.f32 %v348, 1.0
    %v365 = vadd.f32 %v349, 1.0
    %v366 = vadd.f32 %v350, 1.0
    %v367 = vadd.f32 %v351, 1.0
    %v368 = vadd.f32 %v352, 1.0
    %v369 = vmul.f32 %v353, 0.5
    %v370 = vmul.f32 %v354, 0.5
    %v371 = vmul.f32 %v355, 0.5
    %v372 = vmul.f32 %v356, 0.5
    %v373 = vmul.f32 %v357, 0.5
    %v374 = vmul.f32 %v358, 0.5
    %v375 = vmul.f32 %v359, 0.5
    %v376 = vmul.f32 %v360, 0.5
    %v377 = vmul.f32 %v361, 0.5
    %v378 = vmul.f32 %v362, 0.5
    %v379 = vmul.f32 %v363, 0.5
    %v380 = vmul.f32 %v364, 0.5
    %v381 = vmul.f32 %v365, 0.5
    %v382 = vmul.f32 %v366, 0.5
    %v383 = vmul.f32 %v367, 0.5
    %v384 = vmul.f32 %v368, 0.5
    %v385 = vmul.f32 %v195, %v369
    %v386 = vmul.f32 %v198, %v370
    %v387 = vmul.f32 %v203, %v371
    %v388 = vmul.f32 %v206, %v372
    %v389 = vmul.f32 %v211, %v373
    %v390 = vmul.f32 %v214, %v374
    %v391 = vmul.f32 %v219, %v375
    %v392 = vmul.f32 %v222, %v376
    %v393 = vmul.f32 %v227, %v377
    %v394 = vmul.f32 %v230, %v378
    %v395 = vmul.f32 %v235, %v379
    %v396 = vmul.f32 %v238, %v380
    %v397 = vmul.f32 %v243, %v381
    %v398 = vmul.f32 %v246, %v382
    %v399 = vmul.f32 %v251, %v383
    %v400 = vmul.f32 %v254, %v384
    %v401 = vpack.c.bf16 %v386, %v385
    %v402 = vpack.c.bf16 %v388, %v387
    %v403 = vpack.c.bf16 %v390, %v389
    %v404 = vpack.c.bf16 %v392, %v391
    %v405 = vpack.c.bf16 %v394, %v393
    %v406 = vpack.c.bf16 %v396, %v395
    %v407 = vpack.c.bf16 %v398, %v397
    %v408 = vpack.c.bf16 %v400, %v399
    %v409 = vld [vmem:[#allocation2] sm:$0xff]
    %v410 = vld [vmem:[#allocation2 + $0x8] sm:$0xf]
    %v411 = vld [vmem:[#allocation2 + $0xc] sm:$0xff]
    %v412 = vld [vmem:[#allocation2 + $0x14] sm:$0xf]
    %v413 = vld [vmem:[#allocation2 + $0x18] sm:$0xff]
    %v414 = vld [vmem:[#allocation2 + $0x20] sm:$0xf]
    %v415 = vld [vmem:[#allocation2 + $0x24] sm:$0xff]
    %v416 = vld [vmem:[#allocation2 + $0x2c] sm:$0xf]
    %v417 = vld [vmem:[#allocation2 + $0x30] sm:$0xff]
    %v418 = vld [vmem:[#allocation2 + $0x38] sm:$0xf]
    %v419 = vld [vmem:[#allocation2 + $0x3c] sm:$0xff]
    %v420 = vld [vmem:[#allocation2 + $0x44] sm:$0xf]
    %v421 = vld [vmem:[#allocation2 + $0x48] sm:$0xff]
    %v422 = vld [vmem:[#allocation2 + $0x50] sm:$0xf]
    %v423 = vld [vmem:[#allocation2 + $0x54] sm:$0xff]
    %v424 = vld [vmem:[#allocation2 + $0x5c] sm:$0xf]
    %v425 = vld [vmem:[#allocation2 + $0x60] sm:$0xff]
    %v426 = vld [vmem:[#allocation2 + $0x68] sm:$0xf]
    %v427 = vld [vmem:[#allocation2 + $0x6c] sm:$0xff]
    %v428 = vld [vmem:[#allocation2 + $0x74] sm:$0xf]
    %v429 = vld [vmem:[#allocation2 + $0x78] sm:$0xff]
    %v430 = vld [vmem:[#allocation2 + $0x80] sm:$0xf]
    %v431 = vld [vmem:[#allocation2 + $0x84] sm:$0xff]
    %v432 = vld [vmem:[#allocation2 + $0x8c] sm:$0xf]
    %v433 = vld [vmem:[#allocation2 + $0x90] sm:$0xff]
    %v434 = vld [vmem:[#allocation2 + $0x98] sm:$0xf]
    %v435 = vld [vmem:[#allocation2 + $0x9c] sm:$0xff]
    %v436 = vld [vmem:[#allocation2 + $0xa4] sm:$0xf]
    %v437 = vld [vmem:[#allocation2 + $0xa8] sm:$0xff]
    %v438 = vld [vmem:[#allocation2 + $0xb0] sm:$0xf]
    %v439 = vld [vmem:[#allocation2 + $0xb4] sm:$0xff]
    %v440 = vld [vmem:[#allocation2 + $0xbc] sm:$0xf]
    %v473 = vunpack.c.l.b16 %v409
    %v474 = vunpack.c.h.b16 %v409
    %v475 = vunpack.c.l.b16 %v410
    %v476 = vunpack.c.l.b16 %v411
    %v477 = vunpack.c.h.b16 %v411
    %v478 = vunpack.c.l.b16 %v412
    %v479 = vunpack.c.l.b16 %v413
    %v480 = vunpack.c.h.b16 %v413
    %v481 = vunpack.c.l.b16 %v414
    %v482 = vunpack.c.l.b16 %v415
    %v483 = vunpack.c.h.b16 %v415
    %v484 = vunpack.c.l.b16 %v416
    %v485 = vunpack.c.l.b16 %v417
    %v486 = vunpack.c.h.b16 %v417
    %v487 = vunpack.c.l.b16 %v418
    %v488 = vunpack.c.l.b16 %v419
    %v489 = vunpack.c.h.b16 %v419
    %v490 = vunpack.c.l.b16 %v420
    %v491 = vunpack.c.l.b16 %v421
    %v492 = vunpack.c.h.b16 %v421
    %v493 = vunpack.c.l.b16 %v422
    %v494 = vunpack.c.l.b16 %v423
    %v495 = vunpack.c.h.b16 %v423
    %v496 = vunpack.c.l.b16 %v424
    %v497 = vunpack.c.l.b16 %v425
    %v498 = vunpack.c.h.b16 %v425
    %v499 = vunpack.c.l.b16 %v426
    %v500 = vunpack.c.l.b16 %v427
    %v501 = vunpack.c.h.b16 %v427
    %v502 = vunpack.c.l.b16 %v428
    %v503 = vunpack.c.l.b16 %v429
    %v504 = vunpack.c.h.b16 %v429
    %v505 = vunpack.c.l.b16 %v430
    %v506 = vunpack.c.l.b16 %v431
    %v507 = vunpack.c.h.b16 %v431
    %v508 = vunpack.c.l.b16 %v432
    %v509 = vunpack.c.l.b16 %v433
    %v510 = vunpack.c.h.b16 %v433
    %v511 = vunpack.c.l.b16 %v434
    %v512 = vunpack.c.l.b16 %v435
    %v513 = vunpack.c.h.b16 %v435
    %v514 = vunpack.c.l.b16 %v436
    %v515 = vunpack.c.l.b16 %v437
    %v516 = vunpack.c.h.b16 %v437
    %v517 = vunpack.c.l.b16 %v438
    %v518 = vunpack.c.l.b16 %v439
    %v519 = vunpack.c.h.b16 %v439
    %v520 = vunpack.c.l.b16 %v440
    %v521 = vpack.c.b16 %v476, %v473
    %v522 = vpack.c.b16 %v477, %v474
    %v523 = vpack.c.b16 %v478, %v475
    %v524 = vpack.c.b16 %v482, %v479
    %v525 = vpack.c.b16 %v483, %v480
    %v526 = vpack.c.b16 %v484, %v481
    %v527 = vpack.c.b16 %v488, %v485
    %v528 = vpack.c.b16 %v489, %v486
    %v529 = vpack.c.b16 %v490, %v487
    %v530 = vpack.c.b16 %v494, %v491
    %v531 = vpack.c.b16 %v495, %v492
    %v532 = vpack.c.b16 %v496, %v493
    %v533 = vpack.c.b16 %v500, %v497
    %v534 = vpack.c.b16 %v501, %v498
    %v535 = vpack.c.b16 %v502, %v499
    %v536 = vpack.c.b16 %v506, %v503
    %v537 = vpack.c.b16 %v507, %v504
    %v538 = vpack.c.b16 %v508, %v505
    %v539 = vpack.c.b16 %v512, %v509
    %v540 = vpack.c.b16 %v513, %v510
    %v541 = vpack.c.b16 %v514, %v511
    %v542 = vpack.c.b16 %v518, %v515
    %v543 = vpack.c.b16 %v519, %v516
    %v544 = vpack.c.b16 %v520, %v517
    %569 = vmatprep.subr.bf16.mxu0 %v522
    %570 = vmatpush1.bf16.msra.mxu0 %v521
    %571 = vmatprep.subr.bf16.mxu0 %v525
    %572 = vmatpush1.bf16.msra.mxu0 %v524
    %573 = vmatprep.subr.bf16.mxu0 %v528
    %574 = vmatpush1.bf16.msra.mxu0 %v527
    %575 = vmatprep.subr.bf16.mxu0 %v531
    %576 = vmatpush1.bf16.msra.mxu0 %v530
    %577 = vmatprep.subr.bf16.mxu0 %v534
    %578 = vmatpush1.bf16.msra.mxu0 %v533
    %579 = vmatprep.subr.bf16.mxu0 %v537
    %580 = vmatpush1.bf16.msra.mxu0 %v536
    %581 = vmatprep.subr.bf16.mxu0 %v540
    %582 = vmatpush1.bf16.msra.mxu0 %v539
    %583 = vmatprep.subr.bf16.mxu0 %v543
    %584 = vmatpush1.bf16.msra.mxu0 %v542
    %585 = vmatprep.subr.bf16.mxu0 0
    %586 = vmatpush1.bf16.msra.mxu0 0
    %587 = vmatprep.subr.bf16.mxu0 0
    %588 = vmatpush1.bf16.msra.mxu0 0
    %589 = vmatprep.subr.bf16.mxu0 0
    %590 = vmatpush1.bf16.msra.mxu0 0
    %591 = vmatprep.subr.bf16.mxu0 0
    %592 = vmatpush1.bf16.msra.mxu0 0
    %593 = vmatprep.subr.bf16.mxu0 0
    %594 = vmatpush1.bf16.msra.mxu0 0
    %595 = vmatprep.subr.bf16.mxu0 0
    %596 = vmatpush1.bf16.msra.mxu0 0
    %597 = vmatprep.subr.bf16.mxu0 0
    %598 = vmatpush1.bf16.msra.mxu0 0
    %599 = vmatprep.subr.bf16.mxu0 0
    %600 = vmatpush1.bf16.msra.mxu0 0
    %601 = vmatprep.mubr.bf16.mxu0 0
    %602 = vmatmul.mubr.bf16.gmra.mrb[0].mxu0 %v401
    %v603 = vpop.f32.mrb[0].mxu0
    %v604 = vadd.f32 0.0, %v603
    %v605 = vpop.f32.mrb[0].mxu0
    %v606 = vadd.f32 0.0, %v605
    %v607 = vpop.f32.mrb[0].mxu0
    %v608 = vadd.f32 0.0, %v607
    %v609 = vpop.f32.mrb[0].mxu0
    %v610 = vadd.f32 0.0, %v609
    %611 = vmatprep.mubr.bf16.mxu0 0
    %612 = vmatmul.mubr.bf16.gmra.mrb[0].mxu0 %v402
    %v613 = vpop.f32.mrb[0].mxu0
    %v614 = vadd.f32 0.0, %v613
    %v615 = vpop.f32.mrb[0].mxu0
    %v616 = vadd.f32 0.0, %v615
    %v617 = vpop.f32.mrb[0].mxu0
    %v618 = vadd.f32 0.0, %v617
    %v619 = vpop.f32.mrb[0].mxu0
    %v620 = vadd.f32 0.0, %v619
    %621 = vmatprep.mubr.bf16.mxu0 0
    %622 = vmatmul.mubr.bf16.gmra.mrb[0].mxu0 %v403
    %v623 = vpop.f32.mrb[0].mxu0
    %v624 = vadd.f32 0.0, %v623
    %v625 = vpop.f32.mrb[0].mxu0
    %v626 = vadd.f32 0.0, %v625
    %v627 = vpop.f32.mrb[0].mxu0
    %v628 = vadd.f32 0.0, %v627
    %v629 = vpop.f32.mrb[0].mxu0
    %v630 = vadd.f32 0.0, %v629
    %631 = vmatprep.mubr.bf16.mxu0 0
    %632 = vmatmul.mubr.bf16.gmra.mrb[0].mxu0 %v404
    %v633 = vpop.f32.mrb[0].mxu0
    %v634 = vadd.f32 0.0, %v633
    %v635 = vpop.f32.mrb[0].mxu0
    %v636 = vadd.f32 0.0, %v635
    %v637 = vpop.f32.mrb[0].mxu0
    %v638 = vadd.f32 0.0, %v637
    %v639 = vpop.f32.mrb[0].mxu0
    %v640 = vadd.f32 0.0, %v639
    %641 = vmatprep.mubr.bf16.mxu0 0
    %642 = vmatmul.mubr.bf16.gmra.mrb[0].mxu0 %v405
    %v643 = vpop.f32.mrb[0].mxu0
    %v644 = vadd.f32 0.0, %v643
    %v645 = vpop.f32.mrb[0].mxu0
    %v646 = vadd.f32 0.0, %v645
    %v647 = vpop.f32.mrb[0].mxu0
    %v648 = vadd.f32 0.0, %v647
    %v649 = vpop.f32.mrb[0].mxu0
    %v650 = vadd.f32 0.0, %v649
    %651 = vmatprep.mubr.bf16.mxu0 0
    %652 = vmatmul.mubr.bf16.gmra.mrb[0].mxu0 %v406
    %v653 = vpop.f32.mrb[0].mxu0
    %v654 = vadd.f32 0.0, %v653
    %v655 = vpop.f32.mrb[0].mxu0
    %v656 = vadd.f32 0.0, %v655
    %v657 = vpop.f32.mrb[0].mxu0
    %v658 = vadd.f32 0.0, %v657
    %v659 = vpop.f32.mrb[0].mxu0
    %v660 = vadd.f32 0.0, %v659
    %661 = vmatprep.mubr.bf16.mxu0 0
    %662 = vmatmul.mubr.bf16.gmra.mrb[0].mxu0 %v407
    %v663 = vpop.f32.mrb[0].mxu0
    %v664 = vadd.f32 0.0, %v663
    %v665 = vpop.f32.mrb[0].mxu0
    %v666 = vadd.f32 0.0, %v665
    %v667 = vpop.f32.mrb[0].mxu0
    %v668 = vadd.f32 0.0, %v667
    %v669 = vpop.f32.mrb[0].mxu0
    %v670 = vadd.f32 0.0, %v669
    %671 = vmatprep.mubr.bf16.mxu0 0
    %672 = vmatmul.mubr.bf16.gmra.mrb[0].mxu0 %v408
    %v673 = vpop.f32.mrb[0].mxu0
    %v674 = vadd.f32 0.0, %v673
    %v675 = vpop.f32.mrb[0].mxu0
    %v676 = vadd.f32 0.0, %v675
    %v677 = vpop.f32.mrb[0].mxu0
    %v678 = vadd.f32 0.0, %v677
    %v679 = vpop.f32.mrb[0].mxu0
    %v680 = vadd.f32 0.0, %v679
    %681 = vdwg.mxu0
    %682 = vmatprep.subr.bf16.mxu0 0
    %683 = vmatpush1.bf16.msra.mxu0 %v523
    %684 = vmatprep.subr.bf16.mxu0 0
    %685 = vmatpush1.bf16.msra.mxu0 %v526
    %686 = vmatprep.subr.bf16.mxu0 0
    %687 = vmatpush1.bf16.msra.mxu0 %v529
    %688 = vmatprep.subr.bf16.mxu0 0
    %689 = vmatpush1.bf16.msra.mxu0 %v532
    %690 = vmatprep.subr.bf16.mxu0 0
    %691 = vmatpush1.bf16.msra.mxu0 %v535
    %692 = vmatprep.subr.bf16.mxu0 0
    %693 = vmatpush1.bf16.msra.mxu0 %v538
    %694 = vmatprep.subr.bf16.mxu0 0
    %695 = vmatpush1.bf16.msra.mxu0 %v541
    %696 = vmatprep.subr.bf16.mxu0 0
    %697 = vmatpush1.bf16.msra.mxu0 %v544
    %698 = vmatprep.subr.bf16.mxu0 0
    %699 = vmatpush1.bf16.msra.mxu0 0
    %700 = vmatprep.subr.bf16.mxu0 0
    %701 = vmatpush1.bf16.msra.mxu0 0
    %702 = vmatprep.subr.bf16.mxu0 0
    %703 = vmatpush1.bf16.msra.mxu0 0
    %704 = vmatprep.subr.bf16.mxu0 0
    %705 = vmatpush1.bf16.msra.mxu0 0
    %706 = vmatprep.subr.bf16.mxu0 0
    %707 = vmatpush1.bf16.msra.mxu0 0
    %708 = vmatprep.subr.bf16.mxu0 0
    %709 = vmatpush1.bf16.msra.mxu0 0
    %710 = vmatprep.subr.bf16.mxu0 0
    %711 = vmatpush1.bf16.msra.mxu0 0
    %712 = vmatprep.subr.bf16.mxu0 0
    %713 = vmatpush1.bf16.msra.mxu0 0
    %714 = vmatprep.mubr.bf16.mxu0 0
    %715 = vmatmul.mubr.bf16.gmra.mrb[0].mxu0 %v401
    %v716 = vpop.f32.mrb[0].mxu0
    %v717 = vadd.f32 0.0, %v716
    %v718 = vpop.f32.mrb[0].mxu0
    %v719 = vpop.f32.mrb[0].mxu0
    %v720 = vadd.f32 0.0, %v719
    %v721 = vpop.f32.mrb[0].mxu0
    %722 = vmatprep.mubr.bf16.mxu0 0
    %723 = vmatmul.mubr.bf16.gmra.mrb[0].mxu0 %v402
    %v724 = vpop.f32.mrb[0].mxu0
    %v725 = vadd.f32 0.0, %v724
    %v726 = vpop.f32.mrb[0].mxu0
    %v727 = vpop.f32.mrb[0].mxu0
    %v728 = vadd.f32 0.0, %v727
    %v729 = vpop.f32.mrb[0].mxu0
    %730 = vmatprep.mubr.bf16.mxu0 0
    %731 = vmatmul.mubr.bf16.gmra.mrb[0].mxu0 %v403
    %v732 = vpop.f32.mrb[0].mxu0
    %v733 = vadd.f32 0.0, %v732
    %v734 = vpop.f32.mrb[0].mxu0
    %v735 = vpop.f32.mrb[0].mxu0
    %v736 = vadd.f32 0.0, %v735
    %v737 = vpop.f32.mrb[0].mxu0
    %738 = vmatprep.mubr.bf16.mxu0 0
    %739 = vmatmul.mubr.bf16.gmra.mrb[0].mxu0 %v404
    %v740 = vpop.f32.mrb[0].mxu0
    %v741 = vadd.f32 0.0, %v740
    %v742 = vpop.f32.mrb[0].mxu0
    %v743 = vpop.f32.mrb[0].mxu0
    %v744 = vadd.f32 0.0, %v743
    %v745 = vpop.f32.mrb[0].mxu0
    %746 = vmatprep.mubr.bf16.mxu0 0
    %747 = vmatmul.mubr.bf16.gmra.mrb[0].mxu0 %v405
    %v748 = vpop.f32.mrb[0].mxu0
    %v749 = vadd.f32 0.0, %v748
    %v750 = vpop.f32.mrb[0].mxu0
    %v751 = vpop.f32.mrb[0].mxu0
    %v752 = vadd.f32 0.0, %v751
    %v753 = vpop.f32.mrb[0].mxu0
    %754 = vmatprep.mubr.bf16.mxu0 0
    %755 = vmatmul.mubr.bf16.gmra.mrb[0].mxu0 %v406
    %v756 = vpop.f32.mrb[0].mxu0
    %v757 = vadd.f32 0.0, %v756
    %v758 = vpop.f32.mrb[0].mxu0
    %v759 = vpop.f32.mrb[0].mxu0
    %v760 = vadd.f32 0.0, %v759
    %v761 = vpop.f32.mrb[0].mxu0
    %762 = vmatprep.mubr.bf16.mxu0 0
    %763 = vmatmul.mubr.bf16.gmra.mrb[0].mxu0 %v407
    %v764 = vpop.f32.mrb[0].mxu0
    %v765 = vadd.f32 0.0, %v764
    %v766 = vpop.f32.mrb[0].mxu0
    %v767 = vpop.f32.mrb[0].mxu0
    %v768 = vadd.f32 0.0, %v767
    %v769 = vpop.f32.mrb[0].mxu0
    %770 = vmatprep.mubr.bf16.mxu0 0
    %771 = vmatmul.mubr.bf16.gmra.mrb[0].mxu0 %v408
    %v772 = vpop.f32.mrb[0].mxu0
    %v773 = vadd.f32 0.0, %v772
    %v774 = vpop.f32.mrb[0].mxu0
    %v775 = vpop.f32.mrb[0].mxu0
    %v776 = vadd.f32 0.0, %v775
    %v777 = vpop.f32.mrb[0].mxu0
    %778 = vdwg.mxu0
    %779 = vmatprep.subr.mxu0 0.0
    %780 = vmatpush1.xpose.msra.mxu0 %v606
    %781 = vmatprep.subr.mxu0 0.0
    %782 = vmatpush1.xpose.msra.mxu0 %v610
    %783 = vmatprep.subr.mxu0 0.0
    %784 = vmatpush1.xpose.msra.mxu0 %v616
    %785 = vmatprep.subr.mxu0 0.0
    %786 = vmatpush1.xpose.msra.mxu0 %v620
    %787 = vmatprep.subr.mxu0 0.0
    %788 = vmatpush1.xpose.msra.mxu0 %v626
    %789 = vmatprep.subr.mxu0 0.0
    %790 = vmatpush1.xpose.msra.mxu0 %v630
    %791 = vmatprep.subr.mxu0 0.0
    %792 = vmatpush1.xpose.msra.mxu0 %v636
    %793 = vmatprep.subr.mxu0 0.0
    %794 = vmatpush1.xpose.msra.mxu0 %v640
    %795 = vmatprep.subr.mxu0 0.0
    %796 = vmatpush1.xpose.msra.mxu0 %v646
    %797 = vmatprep.subr.mxu0 0.0
    %798 = vmatpush1.xpose.msra.mxu0 %v650
    %799 = vmatprep.subr.mxu0 0.0
    %800 = vmatpush1.xpose.msra.mxu0 %v656
    %801 = vmatprep.subr.mxu0 0.0
    %802 = vmatpush1.xpose.msra.mxu0 %v660
    %803 = vmatprep.subr.mxu0 0.0
    %804 = vmatpush1.xpose.msra.mxu0 %v666
    %805 = vmatprep.subr.mxu0 0.0
    %806 = vmatpush1.xpose.msra.mxu0 %v670
    %807 = vmatprep.subr.mxu0 0.0
    %808 = vmatpush1.xpose.msra.mxu0 %v676
    %809 = vmatprep.subr.mxu0 0.0
    %810 = vmatpush1.xpose.msra.mxu0 %v680
    %811 = vmatprep.subr.mxu0 0.0
    %812 = vmatpush1.xpose.msra.mxu0 0.0
    %813 = vmatprep.subr.mxu0 0.0
    %814 = vmatpush1.xpose.msra.mxu0 0.0
    %815 = vmatprep.subr.mxu0 0.0
    %816 = vmatpush1.xpose.msra.mxu0 0.0
    %817 = vmatprep.subr.mxu0 0.0
    %818 = vmatpush1.xpose.msra.mxu0 0.0
    %819 = vmatprep.subr.mxu0 0.0
    %820 = vmatpush1.xpose.msra.mxu0 0.0
    %821 = vmatprep.subr.mxu0 0.0
    %822 = vmatpush1.xpose.msra.mxu0 0.0
    %823 = vmatprep.subr.mxu0 0.0
    %824 = vmatpush1.xpose.msra.mxu0 0.0
    %825 = vmatprep.subr.mxu0 0.0
    %826 = vmatpush1.xpose.msra.mxu0 0.0
    %827 = vmatprep.subr.mxu0 0.0
    %828 = vmatpush1.xpose.msra.mxu0 0.0
    %829 = vmatprep.subr.mxu0 0.0
    %830 = vmatpush1.xpose.msra.mxu0 0.0
    %831 = vmatprep.subr.mxu0 0.0
    %832 = vmatpush1.xpose.msra.mxu0 0.0
    %833 = vmatprep.subr.mxu0 0.0
    %834 = vmatpush1.xpose.msra.mxu0 0.0
    %835 = vmatprep.subr.mxu0 0.0
    %836 = vmatpush1.xpose.msra.mxu0 0.0
    %837 = vmatprep.subr.mxu0 0.0
    %838 = vmatpush1.xpose.msra.mxu0 0.0
    %839 = vmatprep.subr.mxu0 0.0
    %840 = vmatpush1.xpose.msra.mxu0 0.0
    %841 = vmatprep.subr.mxu0 0.0
    %842 = vmatpush1.xpose.msra.mxu0 0.0
    %843 = vmatprep.mubr.f32.mxu0 0.0
    %844 = vmatmul.mubr.f32.gmra.mrb[0].mxu0 %v604
    %v845 = vpop.f32.mrb[0].mxu0
    %v846 = vadd.f32 0.0, %v845
    %v847 = vpop.f32.mrb[0].mxu0
    %848 = vmatprep.mubr.f32.mxu0 0.0
    %849 = vmatmul.mubr.f32.gmra.mrb[0].mxu0 %v608
    %v850 = vpop.f32.mrb[0].mxu0
    %v851 = vadd.f32 0.0, %v850
    %v852 = vpop.f32.mrb[0].mxu0
    %853 = vmatprep.mubr.f32.mxu0 0.0
    %854 = vmatmul.mubr.f32.gmra.mrb[0].mxu0 %v614
    %v855 = vpop.f32.mrb[0].mxu0
    %v856 = vadd.f32 0.0, %v855
    %v857 = vpop.f32.mrb[0].mxu0
    %858 = vmatprep.mubr.f32.mxu0 0.0
    %859 = vmatmul.mubr.f32.gmra.mrb[0].mxu0 %v618
    %v860 = vpop.f32.mrb[0].mxu0
    %v861 = vadd.f32 0.0, %v860
    %v862 = vpop.f32.mrb[0].mxu0
    %863 = vmatprep.mubr.f32.mxu0 0.0
    %864 = vmatmul.mubr.f32.gmra.mrb[0].mxu0 %v624
    %v865 = vpop.f32.mrb[0].mxu0
    %v866 = vadd.f32 0.0, %v865
    %v867 = vpop.f32.mrb[0].mxu0
    %868 = vmatprep.mubr.f32.mxu0 0.0
    %869 = vmatmul.mubr.f32.gmra.mrb[0].mxu0 %v628
    %v870 = vpop.f32.mrb[0].mxu0
    %v871 = vadd.f32 0.0, %v870
    %v872 = vpop.f32.mrb[0].mxu0
    %873 = vmatprep.mubr.f32.mxu0 0.0
    %874 = vmatmul.mubr.f32.gmra.mrb[0].mxu0 %v634
    %v875 = vpop.f32.mrb[0].mxu0
    %v876 = vadd.f32 0.0, %v875
    %v877 = vpop.f32.mrb[0].mxu0
    %878 = vmatprep.mubr.f32.mxu0 0.0
    %879 = vmatmul.mubr.f32.gmra.mrb[0].mxu0 %v638
    %v880 = vpop.f32.mrb[0].mxu0
    %v881 = vadd.f32 0.0, %v880
    %v882 = vpop.f32.mrb[0].mxu0
    %883 = vmatprep.mubr.f32.mxu0 0.0
    %884 = vmatmul.mubr.f32.gmra.mrb[0].mxu0 %v644
    %v885 = vpop.f32.mrb[0].mxu0
    %v886 = vadd.f32 0.0, %v885
    %v887 = vpop.f32.mrb[0].mxu0
    %888 = vmatprep.mubr.f32.mxu0 0.0
    %889 = vmatmul.mubr.f32.gmra.mrb[0].mxu0 %v648
    %v890 = vpop.f32.mrb[0].mxu0
    %v891 = vadd.f32 0.0, %v890
    %v892 = vpop.f32.mrb[0].mxu0
    %893 = vmatprep.mubr.f32.mxu0 0.0
    %894 = vmatmul.mubr.f32.gmra.mrb[0].mxu0 %v654
    %v895 = vpop.f32.mrb[0].mxu0
    %v896 = vadd.f32 0.0, %v895
    %v897 = vpop.f32.mrb[0].mxu0
    %898 = vmatprep.mubr.f32.mxu0 0.0
    %899 = vmatmul.mubr.f32.gmra.mrb[0].mxu0 %v658
    %v900 = vpop.f32.mrb[0].mxu0
    %v901 = vadd.f32 0.0, %v900
    %v902 = vpop.f32.mrb[0].mxu0
    %903 = vmatprep.mubr.f32.mxu0 0.0
    %904 = vmatmul.mubr.f32.gmra.mrb[0].mxu0 %v664
    %v905 = vpop.f32.mrb[0].mxu0
    %v906 = vadd.f32 0.0, %v905
    %v907 = vpop.f32.mrb[0].mxu0
    %908 = vmatprep.mubr.f32.mxu0 0.0
    %909 = vmatmul.mubr.f32.gmra.mrb[0].mxu0 %v668
    %v910 = vpop.f32.mrb[0].mxu0
    %v911 = vadd.f32 0.0, %v910
    %v912 = vpop.f32.mrb[0].mxu0
    %913 = vmatprep.mubr.f32.mxu0 0.0
    %914 = vmatmul.mubr.f32.gmra.mrb[0].mxu0 %v674
    %v915 = vpop.f32.mrb[0].mxu0
    %v916 = vadd.f32 0.0, %v915
    %v917 = vpop.f32.mrb[0].mxu0
    %918 = vmatprep.mubr.f32.mxu0 0.0
    %919 = vmatmul.mubr.f32.gmra.mrb[0].mxu0 %v678
    %v920 = vpop.f32.mrb[0].mxu0
    %v921 = vadd.f32 0.0, %v920
    %v922 = vpop.f32.mrb[0].mxu0
    %923 = vdwg.mxu0
    %v924 = vmul.f32 %v846, 0.088388346
    %v925 = vmul.f32 %v851, 0.088388346
    %v926 = vmul.f32 %v856, 0.088388346
    %v927 = vmul.f32 %v861, 0.088388346
    %v928 = vmul.f32 %v866, 0.088388346
    %v929 = vmul.f32 %v871, 0.088388346
    %v930 = vmul.f32 %v876, 0.088388346
    %v931 = vmul.f32 %v881, 0.088388346
    %v932 = vmul.f32 %v886, 0.088388346
    %v933 = vmul.f32 %v891, 0.088388346
    %v934 = vmul.f32 %v896, 0.088388346
    %v935 = vmul.f32 %v901, 0.088388346
    %v936 = vmul.f32 %v906, 0.088388346
    %v937 = vmul.f32 %v911, 0.088388346
    %v938 = vmul.f32 %v916, 0.088388346
    %v939 = vmul.f32 %v921, 0.088388346
    %v940 = vlaneseq
    %v941 = vshrl.u32 %v940, 7
    %v942 = vadd.s32 %v941, 8
    %v943 = vadd.s32 %v941, 16
    %v944 = vadd.s32 %v941, 24
    %v945 = vadd.s32 %v941, 32
    %v946 = vadd.s32 %v941, 40
    %v947 = vadd.s32 %v941, 48
    %v948 = vadd.s32 %v941, 56
    %v949 = vadd.s32 %v941, 64
    %v950 = vadd.s32 %v941, 72
    %v951 = vadd.s32 %v941, 80
    %v952 = vadd.s32 %v941, 88
    %v953 = vadd.s32 %v941, 96
    %v954 = vadd.s32 %v941, 104
    %v955 = vadd.s32 %v941, 112
    %v956 = vadd.s32 %v941, 120
    %v957 = vlaneseq
    %v958 = vand.u32 %v957, 127
    %v959 = vshra.s32 %v941, 3
    %v960 = vshra.s32 %v942, 3
    %v961 = vshra.s32 %v943, 3
    %v962 = vshra.s32 %v944, 3
    %v963 = vshra.s32 %v945, 3
    %v964 = vshra.s32 %v946, 3
    %v965 = vshra.s32 %v947, 3
    %v966 = vshra.s32 %v948, 3
    %v967 = vshra.s32 %v949, 3
    %v968 = vshra.s32 %v950, 3
    %v969 = vshra.s32 %v951, 3
    %v970 = vshra.s32 %v952, 3
    %v971 = vshra.s32 %v953, 3
    %v972 = vshra.s32 %v954, 3
    %v973 = vshra.s32 %v955, 3
    %v974 = vshra.s32 %v956, 3
    %v975 = vshra.s32 %v958, 3
    %vm976 = vcmp.eq.s32.totalorder %v959, %v975
    %vm977 = vcmp.eq.s32.totalorder %v960, %v975
    %vm978 = vcmp.eq.s32.totalorder %v961, %v975
    %vm979 = vcmp.eq.s32.totalorder %v962, %v975
    %vm980 = vcmp.eq.s32.totalorder %v963, %v975
    %vm981 = vcmp.eq.s32.totalorder %v964, %v975
    %vm982 = vcmp.eq.s32.totalorder %v965, %v975
    %vm983 = vcmp.eq.s32.totalorder %v966, %v975
    %vm984 = vcmp.eq.s32.totalorder %v967, %v975
    %vm985 = vcmp.eq.s32.totalorder %v968, %v975
    %vm986 = vcmp.eq.s32.totalorder %v969, %v975
    %vm987 = vcmp.eq.s32.totalorder %v970, %v975
    %vm988 = vcmp.eq.s32.totalorder %v971, %v975
    %vm989 = vcmp.eq.s32.totalorder %v972, %v975
    %vm990 = vcmp.eq.s32.totalorder %v973, %v975
    %vm991 = vcmp.eq.s32.totalorder %v974, %v975
    %v992 = vand.u32 %v958, 7
    %vm993 = vcmp.lt.s32.totalorder %v992, 8
    %vm994 = vmand %vm976, %vm993
    %vm995 = vmand %vm977, %vm993
    %vm996 = vmand %vm978, %vm993
    %vm997 = vmand %vm979, %vm993
    %vm998 = vmand %vm980, %vm993
    %vm999 = vmand %vm981, %vm993
    %vm1000 = vmand %vm982, %vm993
    %vm1001 = vmand %vm983, %vm993
    %vm1002 = vmand %vm984, %vm993
    %vm1003 = vmand %vm985, %vm993
    %vm1004 = vmand %vm986, %vm993
    %vm1005 = vmand %vm987, %vm993
    %vm1006 = vmand %vm988, %vm993
    %vm1007 = vmand %vm989, %vm993
    %vm1008 = vmand %vm990, %vm993
    %vm1009 = vmand %vm991, %vm993
    %v1010 = vsel %vm994, %v924, -1e+30
    %v1011 = vsel %vm995, %v925, -1e+30
    %v1012 = vsel %vm996, %v926, -1e+30
    %v1013 = vsel %vm997, %v927, -1e+30
    %v1014 = vsel %vm998, %v928, -1e+30
    %v1015 = vsel %vm999, %v929, -1e+30
    %v1016 = vsel %vm1000, %v930, -1e+30
    %v1017 = vsel %vm1001, %v931, -1e+30
    %v1018 = vsel %vm1002, %v932, -1e+30
    %v1019 = vsel %vm1003, %v933, -1e+30
    %v1020 = vsel %vm1004, %v934, -1e+30
    %v1021 = vsel %vm1005, %v935, -1e+30
    %v1022 = vsel %vm1006, %v936, -1e+30
    %v1023 = vsel %vm1007, %v937, -1e+30
    %v1024 = vsel %vm1008, %v938, -1e+30
    %v1025 = vsel %vm1009, %v939, -1e+30
    %1026 = vmax.xlane.f32.xlu0 %v1010
    %v1027 = vpop.xlane.xlu0 %1026
    %1028 = vmax.xlane.f32.xlu0 %v1011
    %v1029 = vpop.xlane.xlu0 %1028
    %1030 = vmax.xlane.f32.xlu0 %v1012
    %v1031 = vpop.xlane.xlu0 %1030
    %1032 = vmax.xlane.f32.xlu0 %v1013
    %v1033 = vpop.xlane.xlu0 %1032
    %1034 = vmax.xlane.f32.xlu0 %v1014
    %v1035 = vpop.xlane.xlu0 %1034
    %1036 = vmax.xlane.f32.xlu0 %v1015
    %v1037 = vpop.xlane.xlu0 %1036
    %1038 = vmax.xlane.f32.xlu0 %v1016
    %v1039 = vpop.xlane.xlu0 %1038
    %1040 = vmax.xlane.f32.xlu0 %v1017
    %v1041 = vpop.xlane.xlu0 %1040
    %1042 = vmax.xlane.f32.xlu0 %v1018
    %v1043 = vpop.xlane.xlu0 %1042
    %1044 = vmax.xlane.f32.xlu0 %v1019
    %v1045 = vpop.xlane.xlu0 %1044
    %1046 = vmax.xlane.f32.xlu0 %v1020
    %v1047 = vpop.xlane.xlu0 %1046
    %1048 = vmax.xlane.f32.xlu0 %v1021
    %v1049 = vpop.xlane.xlu0 %1048
    %1050 = vmax.xlane.f32.xlu0 %v1022
    %v1051 = vpop.xlane.xlu0 %1050
    %1052 = vmax.xlane.f32.xlu0 %v1023
    %v1053 = vpop.xlane.xlu0 %1052
    %1054 = vmax.xlane.f32.xlu0 %v1024
    %v1055 = vpop.xlane.xlu0 %1054
    %1056 = vmax.xlane.f32.xlu0 %v1025
    %v1057 = vpop.xlane.xlu0 %1056
    %v1058 = vsub.f32 %v1010, %v1027
    %v1059 = vsub.f32 %v1011, %v1029
    %v1060 = vsub.f32 %v1012, %v1031
    %v1061 = vsub.f32 %v1013, %v1033
    %v1062 = vsub.f32 %v1014, %v1035
    %v1063 = vsub.f32 %v1015, %v1037
    %v1064 = vsub.f32 %v1016, %v1039
    %v1065 = vsub.f32 %v1017, %v1041
    %v1066 = vsub.f32 %v1018, %v1043
    %v1067 = vsub.f32 %v1019, %v1045
    %v1068 = vsub.f32 %v1020, %v1047
    %v1069 = vsub.f32 %v1021, %v1049
    %v1070 = vsub.f32 %v1022, %v1051
    %v1071 = vsub.f32 %v1023, %v1053
    %v1072 = vsub.f32 %v1024, %v1055
    %v1073 = vsub.f32 %v1025, %v1057
    %v1074 = vmul.f32 %v1058, 1.442695
    %v1075 = vpow.pop %v1074
    %v1076 = vmul.f32 %v1059, 1.442695
    %v1077 = vpow.pop %v1076
    %v1078 = vmul.f32 %v1060, 1.442695
    %v1079 = vpow.pop %v1078
    %v1080 = vmul.f32 %v1061, 1.442695
    %v1081 = vpow.pop %v1080
    %v1082 = vmul.f32 %v1062, 1.442695
    %v1083 = vpow.pop %v1082
    %v1084 = vmul.f32 %v1063, 1.442695
    %v1085 = vpow.pop %v1084
    %v1086 = vmul.f32 %v1064, 1.442695
    %v1087 = vpow.pop %v1086
    %v1088 = vmul.f32 %v1065, 1.442695
    %v1089 = vpow.pop %v1088
    %v1090 = vmul.f32 %v1066, 1.442695
    %v1091 = vpow.pop %v1090
    %v1092 = vmul.f32 %v1067, 1.442695
    %v1093 = vpow.pop %v1092
    %v1094 = vmul.f32 %v1068, 1.442695
    %v1095 = vpow.pop %v1094
    %v1096 = vmul.f32 %v1069, 1.442695
    %v1097 = vpow.pop %v1096
    %v1098 = vmul.f32 %v1070, 1.442695
    %v1099 = vpow.pop %v1098
    %v1100 = vmul.f32 %v1071, 1.442695
    %v1101 = vpow.pop %v1100
    %v1102 = vmul.f32 %v1072, 1.442695
    %v1103 = vpow.pop %v1102
    %v1104 = vmul.f32 %v1073, 1.442695
    %v1105 = vpow.pop %v1104
    %1106 = vadd.xlane.f32.xlu0 %v1075
    %v1107 = vpop.xlane.xlu0 %1106
    %1108 = vadd.xlane.f32.xlu0 %v1077
    %v1109 = vpop.xlane.xlu0 %1108
    %1110 = vadd.xlane.f32.xlu0 %v1079
    %v1111 = vpop.xlane.xlu0 %1110
    %1112 = vadd.xlane.f32.xlu0 %v1081
    %v1113 = vpop.xlane.xlu0 %1112
    %1114 = vadd.xlane.f32.xlu0 %v1083
    %v1115 = vpop.xlane.xlu0 %1114
    %1116 = vadd.xlane.f32.xlu0 %v1085
    %v1117 = vpop.xlane.xlu0 %1116
    %1118 = vadd.xlane.f32.xlu0 %v1087
    %v1119 = vpop.xlane.xlu0 %1118
    %1120 = vadd.xlane.f32.xlu0 %v1089
    %v1121 = vpop.xlane.xlu0 %1120
    %1122 = vadd.xlane.f32.xlu0 %v1091
    %v1123 = vpop.xlane.xlu0 %1122
    %1124 = vadd.xlane.f32.xlu0 %v1093
    %v1125 = vpop.xlane.xlu0 %1124
    %1126 = vadd.xlane.f32.xlu0 %v1095
    %v1127 = vpop.xlane.xlu0 %1126
    %1128 = vadd.xlane.f32.xlu0 %v1097
    %v1129 = vpop.xlane.xlu0 %1128
    %1130 = vadd.xlane.f32.xlu0 %v1099
    %v1131 = vpop.xlane.xlu0 %1130
    %1132 = vadd.xlane.f32.xlu0 %v1101
    %v1133 = vpop.xlane.xlu0 %1132
    %1134 = vadd.xlane.f32.xlu0 %v1103
    %v1135 = vpop.xlane.xlu0 %1134
    %1136 = vadd.xlane.f32.xlu0 %v1105
    %v1137 = vpop.xlane.xlu0 %1136
    %v1138 = vrcp.pop %v1107
    %v1139 = vmul.f32 %v1075, %v1138
    %v1140 = vrcp.pop %v1109
    %v1141 = vmul.f32 %v1077, %v1140
    %v1142 = vrcp.pop %v1111
    %v1143 = vmul.f32 %v1079, %v1142
    %v1144 = vrcp.pop %v1113
    %v1145 = vmul.f32 %v1081, %v1144
    %v1146 = vrcp.pop %v1115
    %v1147 = vmul.f32 %v1083, %v1146
    %v1148 = vrcp.pop %v1117
    %v1149 = vmul.f32 %v1085, %v1148
    %v1150 = vrcp.pop %v1119
    %v1151 = vmul.f32 %v1087, %v1150
    %v1152 = vrcp.pop %v1121
    %v1153 = vmul.f32 %v1089, %v1152
    %v1154 = vrcp.pop %v1123
    %v1155 = vmul.f32 %v1091, %v1154
    %v1156 = vrcp.pop %v1125
    %v1157 = vmul.f32 %v1093, %v1156
    %v1158 = vrcp.pop %v1127
    %v1159 = vmul.f32 %v1095, %v1158
    %v1160 = vrcp.pop %v1129
    %v1161 = vmul.f32 %v1097, %v1160
    %v1162 = vrcp.pop %v1131
    %v1163 = vmul.f32 %v1099, %v1162
    %v1164 = vrcp.pop %v1133
    %v1165 = vmul.f32 %v1101, %v1164
    %v1166 = vrcp.pop %v1135
    %v1167 = vmul.f32 %v1103, %v1166
    %v1168 = vrcp.pop %v1137
    %v1169 = vmul.f32 %v1105, %v1168
    %1170 = vmatprep.subr.mxu0 0.0
    %1171 = vmatpush1.msra.mxu0 %v717
    %1172 = vmatprep.subr.mxu0 0.0
    %1173 = vmatpush1.msra.mxu0 %v720
    %1174 = vmatprep.subr.mxu0 0.0
    %1175 = vmatpush1.msra.mxu0 %v725
    %1176 = vmatprep.subr.mxu0 0.0
    %1177 = vmatpush1.msra.mxu0 %v728
    %1178 = vmatprep.subr.mxu0 0.0
    %1179 = vmatpush1.msra.mxu0 %v733
    %1180 = vmatprep.subr.mxu0 0.0
    %1181 = vmatpush1.msra.mxu0 %v736
    %1182 = vmatprep.subr.mxu0 0.0
    %1183 = vmatpush1.msra.mxu0 %v741
    %1184 = vmatprep.subr.mxu0 0.0
    %1185 = vmatpush1.msra.mxu0 %v744
    %1186 = vmatprep.subr.mxu0 0.0
    %1187 = vmatpush1.msra.mxu0 %v749
    %1188 = vmatprep.subr.mxu0 0.0
    %1189 = vmatpush1.msra.mxu0 %v752
    %1190 = vmatprep.subr.mxu0 0.0
    %1191 = vmatpush1.msra.mxu0 %v757
    %1192 = vmatprep.subr.mxu0 0.0
    %1193 = vmatpush1.msra.mxu0 %v760
    %1194 = vmatprep.subr.mxu0 0.0
    %1195 = vmatpush1.msra.mxu0 %v765
    %1196 = vmatprep.subr.mxu0 0.0
    %1197 = vmatpush1.msra.mxu0 %v768
    %1198 = vmatprep.subr.mxu0 0.0
    %1199 = vmatpush1.msra.mxu0 %v773
    %1200 = vmatprep.subr.mxu0 0.0
    %1201 = vmatpush1.msra.mxu0 %v776
    %1202 = vmatprep.subr.mxu0 0.0
    %1203 = vmatpush1.msra.mxu0 0.0
    %1204 = vmatprep.subr.mxu0 0.0
    %1205 = vmatpush1.msra.mxu0 0.0
    %1206 = vmatprep.subr.mxu0 0.0
    %1207 = vmatpush1.msra.mxu0 0.0
    %1208 = vmatprep.subr.mxu0 0.0
    %1209 = vmatpush1.msra.mxu0 0.0
    %1210 = vmatprep.subr.mxu0 0.0
    %1211 = vmatpush1.msra.mxu0 0.0
    %1212 = vmatprep.subr.mxu0 0.0
    %1213 = vmatpush1.msra.mxu0 0.0
    %1214 = vmatprep.subr.mxu0 0.0
    %1215 = vmatpush1.msra.mxu0 0.0
    %1216 = vmatprep.subr.mxu0 0.0
    %1217 = vmatpush1.msra.mxu0 0.0
    %1218 = vmatprep.subr.mxu0 0.0
    %1219 = vmatpush1.msra.mxu0 0.0
    %1220 = vmatprep.subr.mxu0 0.0
    %1221 = vmatpush1.msra.mxu0 0.0
    %1222 = vmatprep.subr.mxu0 0.0
    %1223 = vmatpush1.msra.mxu0 0.0
    %1224 = vmatprep.subr.mxu0 0.0
    %1225 = vmatpush1.msra.mxu0 0.0
    %1226 = vmatprep.subr.mxu0 0.0
    %1227 = vmatpush1.msra.mxu0 0.0
    %1228 = vmatprep.subr.mxu0 0.0
    %1229 = vmatpush1.msra.mxu0 0.0
    %1230 = vmatprep.subr.mxu0 0.0
    %1231 = vmatpush1.msra.mxu0 0.0
    %1232 = vmatprep.subr.mxu0 0.0
    %1233 = vmatpush1.msra.mxu0 0.0
    %1234 = vmatprep.mubr.f32.mxu0 0.0
    %1235 = vmatmul.mubr.f32.gmra.mrb[0].mxu0 %v1139
    %v1236 = vpop.f32.mrb[0].mxu0
    %v1237 = vadd.f32 0.0, %v1236
    %v1238 = vpop.f32.mrb[0].mxu0
    %1239 = vmatprep.mubr.f32.mxu0 0.0
    %1240 = vmatmul.mubr.f32.gmra.mrb[0].mxu0 %v1141
    %v1241 = vpop.f32.mrb[0].mxu0
    %v1242 = vadd.f32 0.0, %v1241
    %v1243 = vpop.f32.mrb[0].mxu0
    %1244 = vmatprep.mubr.f32.mxu0 0.0
    %1245 = vmatmul.mubr.f32.gmra.mrb[0].mxu0 %v1143
    %v1246 = vpop.f32.mrb[0].mxu0
    %v1247 = vadd.f32 0.0, %v1246
    %v1248 = vpop.f32.mrb[0].mxu0
    %1249 = vmatprep.mubr.f32.mxu0 0.0
    %1250 = vmatmul.mubr.f32.gmra.mrb[0].mxu0 %v1145
    %v1251 = vpop.f32.mrb[0].mxu0
    %v1252 = vadd.f32 0.0, %v1251
    %v1253 = vpop.f32.mrb[0].mxu0
    %1254 = vmatprep.mubr.f32.mxu0 0.0
    %1255 = vmatmul.mubr.f32.gmra.mrb[0].mxu0 %v1147
    %v1256 = vpop.f32.mrb[0].mxu0
    %v1257 = vadd.f32 0.0, %v1256
    %v1258 = vpop.f32.mrb[0].mxu0
    %1259 = vmatprep.mubr.f32.mxu0 0.0
    %1260 = vmatmul.mubr.f32.gmra.mrb[0].mxu0 %v1149
    %v1261 = vpop.f32.mrb[0].mxu0
    %v1262 = vadd.f32 0.0, %v1261
    %v1263 = vpop.f32.mrb[0].mxu0
    %1264 = vmatprep.mubr.f32.mxu0 0.0
    %1265 = vmatmul.mubr.f32.gmra.mrb[0].mxu0 %v1151
    %v1266 = vpop.f32.mrb[0].mxu0
    %v1267 = vadd.f32 0.0, %v1266
    %v1268 = vpop.f32.mrb[0].mxu0
    %1269 = vmatprep.mubr.f32.mxu0 0.0
    %1270 = vmatmul.mubr.f32.gmra.mrb[0].mxu0 %v1153
    %v1271 = vpop.f32.mrb[0].mxu0
    %v1272 = vadd.f32 0.0, %v1271
    %v1273 = vpop.f32.mrb[0].mxu0
    %1274 = vmatprep.mubr.f32.mxu0 0.0
    %1275 = vmatmul.mubr.f32.gmra.mrb[0].mxu0 %v1155
    %v1276 = vpop.f32.mrb[0].mxu0
    %v1277 = vadd.f32 0.0, %v1276
    %v1278 = vpop.f32.mrb[0].mxu0
    %1279 = vmatprep.mubr.f32.mxu0 0.0
    %1280 = vmatmul.mubr.f32.gmra.mrb[0].mxu0 %v1157
    %v1281 = vpop.f32.mrb[0].mxu0
    %v1282 = vadd.f32 0.0, %v1281
    %v1283 = vpop.f32.mrb[0].mxu0
    %1284 = vmatprep.mubr.f32.mxu0 0.0
    %1285 = vmatmul.mubr.f32.gmra.mrb[0].mxu0 %v1159
    %v1286 = vpop.f32.mrb[0].mxu0
    %v1287 = vadd.f32 0.0, %v1286
    %v1288 = vpop.f32.mrb[0].mxu0
    %1289 = vmatprep.mubr.f32.mxu0 0.0
    %1290 = vmatmul.mubr.f32.gmra.mrb[0].mxu0 %v1161
    %v1291 = vpop.f32.mrb[0].mxu0
    %v1292 = vadd.f32 0.0, %v1291
    %v1293 = vpop.f32.mrb[0].mxu0
    %1294 = vmatprep.mubr.f32.mxu0 0.0
    %1295 = vmatmul.mubr.f32.gmra.mrb[0].mxu0 %v1163
    %v1296 = vpop.f32.mrb[0].mxu0
    %v1297 = vadd.f32 0.0, %v1296
    %v1298 = vpop.f32.mrb[0].mxu0
    %1299 = vmatprep.mubr.f32.mxu0 0.0
    %1300 = vmatmul.mubr.f32.gmra.mrb[0].mxu0 %v1165
    %v1301 = vpop.f32.mrb[0].mxu0
    %v1302 = vadd.f32 0.0, %v1301
    %v1303 = vpop.f32.mrb[0].mxu0
    %1304 = vmatprep.mubr.f32.mxu0 0.0
    %1305 = vmatmul.mubr.f32.gmra.mrb[0].mxu0 %v1167
    %v1306 = vpop.f32.mrb[0].mxu0
    %v1307 = vadd.f32 0.0, %v1306
    %v1308 = vpop.f32.mrb[0].mxu0
    %1309 = vmatprep.mubr.f32.mxu0 0.0
    %1310 = vmatmul.mubr.f32.gmra.mrb[0].mxu0 %v1169
    %v1311 = vpop.f32.mrb[0].mxu0
    %v1312 = vadd.f32 0.0, %v1311
    %v1313 = vpop.f32.mrb[0].mxu0
    %1314 = vdwg.mxu0
    %v1315 = vpack.c.bf16 %v1242, %v1237
    %v1316 = vpack.c.bf16 %v1252, %v1247
    %v1317 = vpack.c.bf16 %v1262, %v1257
    %v1318 = vpack.c.bf16 %v1272, %v1267
    %v1319 = vpack.c.bf16 %v1282, %v1277
    %v1320 = vpack.c.bf16 %v1292, %v1287
    %v1321 = vpack.c.bf16 %v1302, %v1297
    %v1322 = vpack.c.bf16 %v1312, %v1307
    %v1323 = vld [vmem:[%s4] sm:$0xf]
    %v1324 = vld [vmem:[%s4 + $0x4] sm:$0xf]
    %v1325 = vld [vmem:[%s4 + $0x8] sm:$0xf]
    %v1326 = vld [vmem:[%s4 + $0xc] sm:$0xf]
    %v1327 = vld [vmem:[%s4 + $0x10] sm:$0xf]
    %v1328 = vld [vmem:[%s4 + $0x14] sm:$0xf]
    %v1329 = vld [vmem:[%s4 + $0x18] sm:$0xf]
    %v1330 = vld [vmem:[%s4 + $0x1c] sm:$0xf]
    %v1331 = vld [vmem:[%s4 + $0x20] sm:$0xf]
    %v1332 = vld [vmem:[%s4 + $0x24] sm:$0xf]
    %v1333 = vld [vmem:[%s4 + $0x28] sm:$0xf]
    %v1334 = vld [vmem:[%s4 + $0x2c] sm:$0xf]
    %v1335 = vld [vmem:[%s4 + $0x30] sm:$0xf]
    %v1336 = vld [vmem:[%s4 + $0x34] sm:$0xf]
    %v1337 = vld [vmem:[%s4 + $0x38] sm:$0xf]
    %v1338 = vld [vmem:[%s4 + $0x3c] sm:$0xf]
    %v1355 = vunpack.c.l.b16 %v1323
    %v1356 = vunpack.c.l.b16 %v1324
    %v1357 = vunpack.c.l.b16 %v1325
    %v1358 = vunpack.c.l.b16 %v1326
    %v1359 = vunpack.c.l.b16 %v1327
    %v1360 = vunpack.c.l.b16 %v1328
    %v1361 = vunpack.c.l.b16 %v1329
    %v1362 = vunpack.c.l.b16 %v1330
    %v1363 = vunpack.c.l.b16 %v1331
    %v1364 = vunpack.c.l.b16 %v1332
    %v1365 = vunpack.c.l.b16 %v1333
    %v1366 = vunpack.c.l.b16 %v1334
    %v1367 = vunpack.c.l.b16 %v1335
    %v1368 = vunpack.c.l.b16 %v1336
    %v1369 = vunpack.c.l.b16 %v1337
    %v1370 = vunpack.c.l.b16 %v1338
    %v1371 = vpack.c.b16 %v1356, %v1355
    %v1372 = vpack.c.b16 %v1358, %v1357
    %v1373 = vpack.c.b16 %v1360, %v1359
    %v1374 = vpack.c.b16 %v1362, %v1361
    %v1375 = vpack.c.b16 %v1364, %v1363
    %v1376 = vpack.c.b16 %v1366, %v1365
    %v1377 = vpack.c.b16 %v1368, %v1367
    %v1378 = vpack.c.b16 %v1370, %v1369
    %1387 = vmatprep.subr.bf16.mxu0 0
    %1388 = vmatpush1.bf16.msra.mxu0 %v1371
    %1389 = vmatprep.subr.bf16.mxu0 0
    %1390 = vmatpush1.bf16.msra.mxu0 %v1372
    %1391 = vmatprep.subr.bf16.mxu0 0
    %1392 = vmatpush1.bf16.msra.mxu0 %v1373
    %1393 = vmatprep.subr.bf16.mxu0 0
    %1394 = vmatpush1.bf16.msra.mxu0 %v1374
    %1395 = vmatprep.subr.bf16.mxu0 0
    %1396 = vmatpush1.bf16.msra.mxu0 %v1375
    %1397 = vmatprep.subr.bf16.mxu0 0
    %1398 = vmatpush1.bf16.msra.mxu0 %v1376
    %1399 = vmatprep.subr.bf16.mxu0 0
    %1400 = vmatpush1.bf16.msra.mxu0 %v1377
    %1401 = vmatprep.subr.bf16.mxu0 0
    %1402 = vmatpush1.bf16.msra.mxu0 %v1378
    %1403 = vmatprep.subr.bf16.mxu0 0
    %1404 = vmatpush1.bf16.msra.mxu0 0
    %1405 = vmatprep.subr.bf16.mxu0 0
    %1406 = vmatpush1.bf16.msra.mxu0 0
    %1407 = vmatprep.subr.bf16.mxu0 0
    %1408 = vmatpush1.bf16.msra.mxu0 0
    %1409 = vmatprep.subr.bf16.mxu0 0
    %1410 = vmatpush1.bf16.msra.mxu0 0
    %1411 = vmatprep.subr.bf16.mxu0 0
    %1412 = vmatpush1.bf16.msra.mxu0 0
    %1413 = vmatprep.subr.bf16.mxu0 0
    %1414 = vmatpush1.bf16.msra.mxu0 0
    %1415 = vmatprep.subr.bf16.mxu0 0
    %1416 = vmatpush1.bf16.msra.mxu0 0
    %1417 = vmatprep.subr.bf16.mxu0 0
    %1418 = vmatpush1.bf16.msra.mxu0 0
    %1419 = vmatprep.mubr.bf16.mxu0 0
    %1420 = vmatmul.mubr.bf16.gmra.mrb[0].mxu0 %v1315
    %v1421 = vpop.f32.mrb[0].mxu0
    %v1422 = vadd.f32 0.0, %v1421
    %v1423 = vpop.f32.mrb[0].mxu0
    %v1424 = vpop.f32.mrb[0].mxu0
    %v1425 = vadd.f32 0.0, %v1424
    %v1426 = vpop.f32.mrb[0].mxu0
    %1427 = vmatprep.mubr.bf16.mxu0 0
    %1428 = vmatmul.mubr.bf16.gmra.mrb[0].mxu0 %v1316
    %v1429 = vpop.f32.mrb[0].mxu0
    %v1430 = vadd.f32 0.0, %v1429
    %v1431 = vpop.f32.mrb[0].mxu0
    %v1432 = vpop.f32.mrb[0].mxu0
    %v1433 = vadd.f32 0.0, %v1432
    %v1434 = vpop.f32.mrb[0].mxu0
    %1435 = vmatprep.mubr.bf16.mxu0 0
    %1436 = vmatmul.mubr.bf16.gmra.mrb[0].mxu0 %v1317
    %v1437 = vpop.f32.mrb[0].mxu0
    %v1438 = vadd.f32 0.0, %v1437
    %v1439 = vpop.f32.mrb[0].mxu0
    %v1440 = vpop.f32.mrb[0].mxu0
    %v1441 = vadd.f32 0.0, %v1440
    %v1442 = vpop.f32.mrb[0].mxu0
    %1443 = vmatprep.mubr.bf16.mxu0 0
    %1444 = vmatmul.mubr.bf16.gmra.mrb[0].mxu0 %v1318
    %v1445 = vpop.f32.mrb[0].mxu0
    %v1446 = vadd.f32 0.0, %v1445
    %v1447 = vpop.f32.mrb[0].mxu0
    %v1448 = vpop.f32.mrb[0].mxu0
    %v1449 = vadd.f32 0.0, %v1448
    %v1450 = vpop.f32.mrb[0].mxu0
    %1451 = vmatprep.mubr.bf16.mxu0 0
    %1452 = vmatmul.mubr.bf16.gmra.mrb[0].mxu0 %v1319
    %v1453 = vpop.f32.mrb[0].mxu0
    %v1454 = vadd.f32 0.0, %v1453
    %v1455 = vpop.f32.mrb[0].mxu0
    %v1456 = vpop.f32.mrb[0].mxu0
    %v1457 = vadd.f32 0.0, %v1456
    %v1458 = vpop.f32.mrb[0].mxu0
    %1459 = vmatprep.mubr.bf16.mxu0 0
    %1460 = vmatmul.mubr.bf16.gmra.mrb[0].mxu0 %v1320
    %v1461 = vpop.f32.mrb[0].mxu0
    %v1462 = vadd.f32 0.0, %v1461
    %v1463 = vpop.f32.mrb[0].mxu0
    %v1464 = vpop.f32.mrb[0].mxu0
    %v1465 = vadd.f32 0.0, %v1464
    %v1466 = vpop.f32.mrb[0].mxu0
    %1467 = vmatprep.mubr.bf16.mxu0 0
    %1468 = vmatmul.mubr.bf16.gmra.mrb[0].mxu0 %v1321
    %v1469 = vpop.f32.mrb[0].mxu0
    %v1470 = vadd.f32 0.0, %v1469
    %v1471 = vpop.f32.mrb[0].mxu0
    %v1472 = vpop.f32.mrb[0].mxu0
    %v1473 = vadd.f32 0.0, %v1472
    %v1474 = vpop.f32.mrb[0].mxu0
    %1475 = vmatprep.mubr.bf16.mxu0 0
    %1476 = vmatmul.mubr.bf16.gmra.mrb[0].mxu0 %v1322
    %v1477 = vpop.f32.mrb[0].mxu0
    %v1478 = vadd.f32 0.0, %v1477
    %v1479 = vpop.f32.mrb[0].mxu0
    %v1480 = vpop.f32.mrb[0].mxu0
    %v1481 = vadd.f32 0.0, %v1480
    %v1482 = vpop.f32.mrb[0].mxu0
    %1483 = vdwg.mxu0
    %v1484 = vadd.f32 %v385, %v1422
    %v1485 = vadd.f32 %v386, %v1425
    %v1486 = vadd.f32 %v387, %v1430
    %v1487 = vadd.f32 %v388, %v1433
    %v1488 = vadd.f32 %v389, %v1438
    %v1489 = vadd.f32 %v390, %v1441
    %v1490 = vadd.f32 %v391, %v1446
    %v1491 = vadd.f32 %v392, %v1449
    %v1492 = vadd.f32 %v393, %v1454
    %v1493 = vadd.f32 %v394, %v1457
    %v1494 = vadd.f32 %v395, %v1462
    %v1495 = vadd.f32 %v396, %v1465
    %v1496 = vadd.f32 %v397, %v1470
    %v1497 = vadd.f32 %v398, %v1473
    %v1498 = vadd.f32 %v399, %v1478
    %v1499 = vadd.f32 %v400, %v1481
    %v1500 = vpack.c.bf16 %v1484, %v1484
    %v1501 = vpack.c.bf16 %v1485, %v1485
    %v1502 = vpack.c.bf16 %v1486, %v1486
    %v1503 = vpack.c.bf16 %v1487, %v1487
    %v1504 = vpack.c.bf16 %v1488, %v1488
    %v1505 = vpack.c.bf16 %v1489, %v1489
    %v1506 = vpack.c.bf16 %v1490, %v1490
    %v1507 = vpack.c.bf16 %v1491, %v1491
    %v1508 = vpack.c.bf16 %v1492, %v1492
    %v1509 = vpack.c.bf16 %v1493, %v1493
    %v1510 = vpack.c.bf16 %v1494, %v1494
    %v1511 = vpack.c.bf16 %v1495, %v1495
    %v1512 = vpack.c.bf16 %v1496, %v1496
    %v1513 = vpack.c.bf16 %v1497, %v1497
    %v1514 = vpack.c.bf16 %v1498, %v1498
    %v1515 = vpack.c.bf16 %v1499, %v1499
    %v1516 = vld [vmem:[#allocation5] sm:$0xf]
    %v1517 = vld [vmem:[#allocation5 + $0x4] sm:$0xf]
    %v1518 = vld [vmem:[#allocation5 + $0x8] sm:$0xf]
    %v1519 = vld [vmem:[#allocation5 + $0xc] sm:$0xf]
    %v1520 = vld [vmem:[#allocation5 + $0x10] sm:$0xf]
    %v1521 = vld [vmem:[#allocation5 + $0x14] sm:$0xf]
    %v1522 = vld [vmem:[#allocation5 + $0x18] sm:$0xf]
    %v1523 = vld [vmem:[#allocation5 + $0x1c] sm:$0xf]
    %v1524 = vld [vmem:[#allocation5 + $0x20] sm:$0xf]
    %v1525 = vld [vmem:[#allocation5 + $0x24] sm:$0xf]
    %v1526 = vld [vmem:[#allocation5 + $0x28] sm:$0xf]
    %v1527 = vld [vmem:[#allocation5 + $0x2c] sm:$0xf]
    %v1528 = vld [vmem:[#allocation5 + $0x30] sm:$0xf]
    %v1529 = vld [vmem:[#allocation5 + $0x34] sm:$0xf]
    %v1530 = vld [vmem:[#allocation5 + $0x38] sm:$0xf]
    %v1531 = vld [vmem:[#allocation5 + $0x3c] sm:$0xf]
    %v1532 = vld [vmem:[%s6] sm:$0x1]
    %v1534 = vlaneseq
    %v1535 = vshrl.u32 %v1534, 7
    %v1536 = vsub.s32 0, %v1535
    %v1537 = vrot.slane %v1532, %v1536
    %v1555 = vunpack.c.l.b16 %v1500
    %v1556 = vunpack.c.l.b16 %v1501
    %v1557 = vunpack.c.l.b16 %v1502
    %v1558 = vunpack.c.l.b16 %v1503
    %v1559 = vunpack.c.l.b16 %v1504
    %v1560 = vunpack.c.l.b16 %v1505
    %v1561 = vunpack.c.l.b16 %v1506
    %v1562 = vunpack.c.l.b16 %v1507
    %v1563 = vunpack.c.l.b16 %v1508
    %v1564 = vunpack.c.l.b16 %v1509
    %v1565 = vunpack.c.l.b16 %v1510
    %v1566 = vunpack.c.l.b16 %v1511
    %v1567 = vunpack.c.l.b16 %v1512
    %v1568 = vunpack.c.l.b16 %v1513
    %v1569 = vunpack.c.l.b16 %v1514
    %v1570 = vunpack.c.l.b16 %v1515
    %v1571 = vrot.slane %v1556, 7
    %vm1572 = vcmask 1041409
    %v1573 = vsel %vm1572, %v1571, %v1555
    %v1574 = vrot.slane %v1557, 6
    %vm1575 = vcmask 1042434
    %v1576 = vsel %vm1575, %v1574, %v1573
    %v1577 = vrot.slane %v1558, 5
    %vm1578 = vcmask 1043459
    %v1579 = vsel %vm1578, %v1577, %v1576
    %v1580 = vrot.slane %v1559, 4
    %vm1581 = vcmask 1044484
    %v1582 = vsel %vm1581, %v1580, %v1579
    %v1583 = vrot.slane %v1560, 3
    %vm1584 = vcmask 1045509
    %v1585 = vsel %vm1584, %v1583, %v1582
    %v1586 = vrot.slane %v1561, 2
    %vm1587 = vcmask 1046534
    %v1588 = vsel %vm1587, %v1586, %v1585
    %v1589 = vrot.slane %v1562, 1
    %vm1590 = vcmask 1047559
    %v1591 = vsel %vm1590, %v1589, %v1588
    %v1592 = vrot.slane %v1564, 7
    %v1593 = vsel %vm1572, %v1592, %v1563
    %v1594 = vrot.slane %v1565, 6
    %v1595 = vsel %vm1575, %v1594, %v1593
    %v1596 = vrot.slane %v1566, 5
    %v1597 = vsel %vm1578, %v1596, %v1595
    %v1598 = vrot.slane %v1567, 4
    %v1599 = vsel %vm1581, %v1598, %v1597
    %v1600 = vrot.slane %v1568, 3
    %v1601 = vsel %vm1584, %v1600, %v1599
    %v1602 = vrot.slane %v1569, 2
    %v1603 = vsel %vm1587, %v1602, %v1601
    %v1604 = vrot.slane %v1570, 1
    %v1605 = vsel %vm1590, %v1604, %v1603
    %v1606 = vpack.c.b16 %v1605, %v1591
    %v1624 = vunpack.c.l.b16 %v1516
    %v1625 = vunpack.c.l.b16 %v1517
    %v1626 = vunpack.c.l.b16 %v1518
    %v1627 = vunpack.c.l.b16 %v1519
    %v1628 = vunpack.c.l.b16 %v1520
    %v1629 = vunpack.c.l.b16 %v1521
    %v1630 = vunpack.c.l.b16 %v1522
    %v1631 = vunpack.c.l.b16 %v1523
    %v1632 = vunpack.c.l.b16 %v1524
    %v1633 = vunpack.c.l.b16 %v1525
    %v1634 = vunpack.c.l.b16 %v1526
    %v1635 = vunpack.c.l.b16 %v1527
    %v1636 = vunpack.c.l.b16 %v1528
    %v1637 = vunpack.c.l.b16 %v1529
    %v1638 = vunpack.c.l.b16 %v1530
    %v1639 = vunpack.c.l.b16 %v1531
    %v1640 = vpack.c.b16 %v1625, %v1624
    %v1641 = vpack.c.b16 %v1627, %v1626
    %v1642 = vpack.c.b16 %v1629, %v1628
    %v1643 = vpack.c.b16 %v1631, %v1630
    %v1644 = vpack.c.b16 %v1633, %v1632
    %v1645 = vpack.c.b16 %v1635, %v1634
    %v1646 = vpack.c.b16 %v1637, %v1636
    %v1647 = vpack.c.b16 %v1639, %v1638
    %1656 = vmatprep.subr.bf16.mxu0 0
    %1657 = vmatpush1.bf16.msra.mxu0 %v1640
    %1658 = vmatprep.subr.bf16.mxu0 0
    %1659 = vmatpush1.bf16.msra.mxu0 %v1641
    %1660 = vmatprep.subr.bf16.mxu0 0
    %1661 = vmatpush1.bf16.msra.mxu0 %v1642
    %1662 = vmatprep.subr.bf16.mxu0 0
    %1663 = vmatpush1.bf16.msra.mxu0 %v1643
    %1664 = vmatprep.subr.bf16.mxu0 0
    %1665 = vmatpush1.bf16.msra.mxu0 %v1644
    %1666 = vmatprep.subr.bf16.mxu0 0
    %1667 = vmatpush1.bf16.msra.mxu0 %v1645
    %1668 = vmatprep.subr.bf16.mxu0 0
    %1669 = vmatpush1.bf16.msra.mxu0 %v1646
    %1670 = vmatprep.subr.bf16.mxu0 0
    %1671 = vmatpush1.bf16.msra.mxu0 %v1647
    %1672 = vmatprep.subr.bf16.mxu0 0
    %1673 = vmatpush1.bf16.msra.mxu0 0
    %1674 = vmatprep.subr.bf16.mxu0 0
    %1675 = vmatpush1.bf16.msra.mxu0 0
    %1676 = vmatprep.subr.bf16.mxu0 0
    %1677 = vmatpush1.bf16.msra.mxu0 0
    %1678 = vmatprep.subr.bf16.mxu0 0
    %1679 = vmatpush1.bf16.msra.mxu0 0
    %1680 = vmatprep.subr.bf16.mxu0 0
    %1681 = vmatpush1.bf16.msra.mxu0 0
    %1682 = vmatprep.subr.bf16.mxu0 0
    %1683 = vmatpush1.bf16.msra.mxu0 0
    %1684 = vmatprep.subr.bf16.mxu0 0
    %1685 = vmatpush1.bf16.msra.mxu0 0
    %1686 = vmatprep.subr.bf16.mxu0 0
    %1687 = vmatpush1.bf16.msra.mxu0 0
    %1688 = vmatprep.mubr.bf16.mxu0 0
    %1689 = vmatmul.mubr.bf16.gmra.mrb[0].mxu0 %v1606
    %v1690 = vpop.f32.mrb[0].mxu0
    %v1691 = vadd.f32 %v1537, %v1690
    %v1692 = vpop.f32.mrb[0].mxu0
    %v1693 = vpop.f32.mrb[0].mxu0
    %v1694 = vadd.f32 %v1537, %v1693
    %v1695 = vpop.f32.mrb[0].mxu0
    %1696 = vdwg.mxu0
    %1697 = vst [vmem:[#allocation7] sm:$0xff] %v1691
    %1698 = vst [vmem:[#allocation7 + $0x8] sm:$0xff] %v1694
    // Predicated region
    $region38: #{tpu_custom_call.1} parent=1 // pred_check
      _
    $region39: #{tpu_custom_call.1} parent=1 // pred_check_branch
      %1700 = sbr.rel (0) target = $region41
    $region40: #{tpu_custom_call.1} parent=1 // pred_region
      %s1702 = ssub.s32 256, 256
      %1703 = vsyncadd [#allocation4], %s1702
      %s1704 = sshll.u32 [#allocation7], 4
      %s1705 = int_to_ptr.vmem [resolvable:$true] %s1704
      %1710 = dma.vmem_to_hbm [thread:$0]  %s1705, 256, %s7, [#allocation4], 128, 128, 8
    $region41: #{tpu_custom_call.1} parent=1 // pred_fallthru
      _
    // Predicated region
    $region42: #{tpu_custom_call.1} parent=1 // pred_check
      _
    $region43: #{tpu_custom_call.1} parent=1 // pred_check_branch
      %1712 = sbr.rel (0) target = $region45
    $region44: #{tpu_custom_call.1} parent=1 // pred_region
      %1713 = dma.done [#allocation4], 256
    $region45: #{tpu_custom_call.1} parent=1 // pred_fallthru
      _
    %1714 = vsyncpa [#allocation3], 1
    %1715 = vsyncpa [#allocation6], 1
    %1716 = vsyncpa [#allocation4], 1

</llo_original>
